<compile_context>
chip_gen: v5e
topology: v5e:2x2
jax: 0.10.0
libtpu: 0.0.40
codegen_flags: <defaults>
</compile_context>

<pallas_src>
import math

import jax
import jax.numpy as jnp
from jax import lax
from jax.experimental import pallas as pl
from jax.experimental.pallas import tpu as pltpu

BT_MAX = 32   # batch tile (sublane-aligned)
LANES = 128


# ----------------------------- Pallas kernel -------------------------------

def _mnist_fused_kernel(x_ref, t1_ref, b1_ref, t2_ref, b2_ref,
                        wf1_ref, bf1_ref, wf2_ref, bf2_ref, o_ref):
    f32, bf16 = jnp.float32, jnp.bfloat16
    bt = o_ref.shape[0]                       # static batch tile

    x = x_ref[...]                            # (28, bt, 32) f32, width on lanes

    # ---- conv1 (1->10, k=5, VALID): 5 row-Toeplitz MXU dots, K=32 -----------
    # acc1[oh*bt + b, (ow%2)*128 + co*12 + ow//2]
    acc1 = None
    for kh in range(5):
        lhs = x[kh:kh + 24].reshape(24 * bt, 32).astype(bf16)
        part = jnp.dot(lhs, t1_ref[kh], preferred_element_type=f32)
        acc1 = part if acc1 is None else acc1 + part
    a1 = jnp.maximum(acc1 + b1_ref[...], 0.0)                # ReLU, (24*bt, 256)

    # ---- pool1 (2x2/2): height = leading-dim pair max, width = half-lane max
    a1 = a1.reshape(12, 2, bt, 256)
    ph = jnp.maximum(a1[:, 0], a1[:, 1])                      # (12, bt, 256)
    m1 = jnp.maximum(ph[..., :LANES], ph[..., LANES:])        # (12, bt, 128)
    # lanes: ci*12 + pooled_col (ci<10, col<12); remaining lanes are exactly 0

    # ---- conv2 (10->20, k=5, VALID): 5 row-Toeplitz MXU dots, K=128 ---------
    acc2 = None
    for kh in range(5):
        lhs = m1[kh:kh + 8].reshape(8 * bt, LANES).astype(bf16)
        part = jnp.dot(lhs, t2_ref[kh], preferred_element_type=f32)
        acc2 = part if acc2 is None else acc2 + part
    a2 = jnp.maximum(acc2 + b2_ref[...], 0.0)                 # (8*bt, 256)

    # ---- pool2 ---------------------------------------------------------------
    a2 = a2.reshape(4, 2, bt, 256)
    ph2 = jnp.maximum(a2[:, 0], a2[:, 1])                     # (4, bt, 256)
    m2 = jnp.maximum(ph2[..., :LANES], ph2[..., LANES:])      # (4, bt, 128)
    # lanes: c2*4 + pooled_col (c2<20, col<4); remaining lanes are exactly 0

    # ---- fc1 (320->50) + ReLU: single K=512 MXU dot --------------------------
    z = jnp.concatenate([m2[0], m2[1], m2[2], m2[3]], axis=-1)    # (bt, 512)
    h1 = jnp.maximum(
        jnp.dot(z.astype(bf16), wf1_ref[...], preferred_element_type=f32)
        + bf1_ref[...], 0.0)                                   # (bt, 128)

    # ---- fc2 (50->10) + ReLU --------------------------------------------------
    out = jnp.maximum(
        jnp.dot(h1.astype(bf16), wf2_ref[...], preferred_element_type=f32)
        + bf2_ref[...], 0.0)
    o_ref[...] = out.astype(o_ref.dtype)


# --------------------------- weight preprocessing ---------------------------

def _prep_params(params):
    """Fold the PyTorch weights into lane-dense Toeplitz / matmul form (bf16)."""
    w1, b1, w2, b2, fw1, fb1, fw2, fb2 = [p.astype(jnp.float32) for p in params]
    bf16 = jnp.bfloat16

    # conv1 -> per-kh width-Toeplitz T1[kh, iw, lane]:
    #   lane = (ow % 2)*128 + co*12 + ow//2
    #   T1[kh, iw, lane(co, ow)] = w1[co, 0, kh, iw - ow] if 0 <= iw-ow < 5 else 0
    S1 = (jnp.arange(28)[None, :, None]
          == jnp.arange(24)[None, None, :] + jnp.arange(5)[:, None, None]
          ).astype(jnp.float32)                                    # (kw, iw, ow)
    t1 = jnp.einsum('chk,kio->hico', w1[:, 0], S1)                 # (kh, iw, co, ow)
    t1 = t1.reshape(5, 28, 10, 12, 2)                              # ow = 2*j + p
    t1 = jnp.transpose(t1, (0, 1, 4, 2, 3)).reshape(5, 28, 2, 120)
    t1 = jnp.pad(t1, ((0, 0), (0, 4), (0, 0), (0, 8)))             # iw->32, 120->128
    t1 = t1.reshape(5, 32, 256).astype(bf16)
    b1_lane = jnp.tile(jnp.pad(jnp.repeat(b1, 12), (0, 8)), 2).reshape(1, 256)

    # conv2 -> per-kh width-Toeplitz over (ci x pooled-col): T2[kh, 128, 256]
    #   row = ci*12 + j (pooled col),  col = (ow % 2)*128 + c2*4 + ow//2
    S2 = (jnp.arange(12)[None, :, None]
          == jnp.arange(8)[None, None, :] + jnp.arange(5)[:, None, None]
          ).astype(jnp.float32)                                    # (kw, j, ow)
    t2 = jnp.einsum('dchk,kjo->hcjdo', w2, S2)                     # (kh, ci, j, c2, ow)
    t2 = t2.reshape(5, 120, 20, 8)
    t2 = jnp.pad(t2, ((0, 0), (0, 8), (0, 0), (0, 0)))             # rows 120->128
    t2 = t2.reshape(5, 128, 20, 4, 2)                              # ow = 2*j2 + p
    t2 = jnp.transpose(t2, (0, 1, 4, 2, 3)).reshape(5, 128, 2, 80)
    t2 = jnp.pad(t2, ((0, 0), (0, 0), (0, 0), (0, 48)))
    t2 = t2.reshape(5, 128, 256).astype(bf16)
    b2_lane = jnp.tile(jnp.pad(jnp.repeat(b2, 4), (0, 48)), 2).reshape(1, 256)

    # fc1: row = i2*128 + c2*4 + j2  (matches the pool2 lane layout / concat)
    wf1 = jnp.transpose(fw1.reshape(50, 20, 4, 4), (2, 1, 3, 0))   # (i2, c2, j2, o)
    wf1 = jnp.pad(wf1.reshape(4, 80, 50), ((0, 0), (0, 48), (0, 78)))
    wf1 = wf1.reshape(512, 128).astype(bf16)
    bf1_lane = jnp.pad(fb1, (0, 78)).reshape(1, 128)

    # fc2
    wf2p = jnp.pad(fw2.T, ((0, 78), (0, 118))).astype(bf16)        # (128, 128)
    bf2_lane = jnp.pad(fb2, (0, 118)).reshape(1, 128)

    return t1, b1_lane, t2, b2_lane, wf1, bf1_lane, wf2p, bf2_lane


# ------------------------------- wrapper ------------------------------------

def mnist_convnet_forward(x, params):
    """Exact MNISTConvNet forward.  x: (N, 1, 28, 28) f32 -> (N, 10) f32."""
    N = x.shape[0]
    bt = min(BT_MAX, max(8, ((N + 7) // 8) * 8))   # static, shape-derived
    n_pad = (-N) % bt
    Np = N + n_pad

    # (N,1,28,28) NCHW -> (28, Np, 32): H leading, batch on sublanes,
    # zero-padded width on lanes (lane-dense input, no 1-wide trailing dim).
    xs = x.astype(jnp.float32).reshape(N, 28, 28)
    xs = jnp.pad(xs, ((0, n_pad), (0, 0), (0, 4)))
    x_t = jnp.transpose(xs, (1, 0, 2))

    t1, b1_l, t2, b2_l, wf1, bf1_l, wf2, bf2_l = _prep_params(params)

    out = pl.pallas_call(
        _mnist_fused_kernel,
        out_shape=jax.ShapeDtypeStruct((Np, LANES), jnp.float32),
        grid_spec=pltpu.PrefetchScalarGridSpec(
            num_scalar_prefetch=0,
            grid=(Np // bt,),
            in_specs=[
                pl.BlockSpec((28, bt, 32), lambda i: (0, i, 0)),    # x
                pl.BlockSpec((5, 32, 256), lambda i: (0, 0, 0)),    # T1 (bf16)
                pl.BlockSpec((1, 256), lambda i: (0, 0)),           # b1 lanes
                pl.BlockSpec((5, 128, 256), lambda i: (0, 0, 0)),   # T2 (bf16)
                pl.BlockSpec((1, 256), lambda i: (0, 0)),           # b2 lanes
                pl.BlockSpec((512, 128), lambda i: (0, 0)),         # Wf1 (bf16)
                pl.BlockSpec((1, 128), lambda i: (0, 0)),           # bf1 lanes
                pl.BlockSpec((128, 128), lambda i: (0, 0)),         # Wf2 (bf16)
                pl.BlockSpec((1, 128), lambda i: (0, 0)),           # bf2 lanes
            ],
            out_specs=pl.BlockSpec((bt, LANES), lambda i: (i, 0)),
        ),
        compiler_params=pltpu.CompilerParams(
            dimension_semantics=("parallel",),
            vmem_limit_bytes=32 * 1024 * 1024,
        ),
    )(x_t, t1, b1_l, t2, b2_l, wf1, bf1_l, wf2, bf2_l)

    return out[:N, :10]


# --------------------------- pure-JAX reference -----------------------------

def reference_forward(x, params):
    w1, b1, w2, b2, fw1, fb1, fw2, fb2 = params
    dn = ("NCHW", "OIHW", "NCHW")
    y = lax.conv_general_dilated(x, w1, (1, 1), "VALID", dimension_numbers=dn)
    y = jnp.maximum(y + b1.reshape(1, -1, 1, 1), 0.0)
    y = lax.reduce_window(y, -jnp.inf, lax.max, (1, 1, 2, 2), (1, 1, 2, 2), "VALID")
    y = lax.conv_general_dilated(y, w2, (1, 1), "VALID", dimension_numbers=dn)
    y = jnp.maximum(y + b2.reshape(1, -1, 1, 1), 0.0)
    y = lax.reduce_window(y, -jnp.inf, lax.max, (1, 1, 2, 2), (1, 1, 2, 2), "VALID")
    y = y.reshape(y.shape[0], -1)
    y = jnp.maximum(y @ fw1.T + fb1, 0.0)
    y = jnp.maximum(y @ fw2.T + fb2, 0.0)
    return y


# --------------------------------- main -------------------------------------

if __name__ == "__main__":
    key = jax.random.PRNGKey(0)
    ks = jax.random.split(key, 9)

    def uinit(k, shape, fan_in):
        bound = 1.0 / math.sqrt(fan_in)
        return jax.random.uniform(k, shape, jnp.float32, -bound, bound)

    # Deterministic synthetic parameters (PyTorch-default-like uniform init).
    w1 = uinit(ks[1], (10, 1, 5, 5), 1 * 5 * 5)
    b1 = uinit(ks[2], (10,), 1 * 5 * 5)
    w2 = uinit(ks[3], (20, 10, 5, 5), 10 * 5 * 5)
    b2 = uinit(ks[4], (20,), 10 * 5 * 5)
    fw1 = uinit(ks[5], (50, 320), 320)
    fb1 = uinit(ks[6], (50,), 320)
    fw2 = uinit(ks[7], (10, 50), 50)
    fb2 = uinit(ks[8], (10,), 50)
    params = (w1, b1, w2, b2, fw1, fb1, fw2, fb2)

    # Input: small batch, shapes dictated by the module (28x28, 1 channel).
    x = jax.random.normal(ks[0], (2, 1, 28, 28), jnp.float32)

    fwd = jax.jit(mnist_convnet_forward)
    out = jax.block_until_ready(fwd(x, params))

    ref = jax.block_until_ready(reference_forward(x, params))
    err = float(jnp.max(jnp.abs(out - ref)))
    assert out.shape == (2, 10) and out.dtype == jnp.float32
    # bf16 MXU operands (per perf review) introduce ~1e-2-level deviation budget.
    assert err < 2e-2, f"mismatch vs reference: max abs err = {err}"

    print("KERNEL_OK")
</pallas_src>

<mosaic_0001>
module attributes {stable_mosaic.version = 11 : i64} {
  func.func @_mnist_fused_kernel(%arg0: i32, %arg1: memref<28x8x32xf32, #tpu.memory_space<vmem>>, %arg2: memref<5x32x256xbf16, #tpu.memory_space<vmem>>, %arg3: memref<1x256xf32, #tpu.memory_space<vmem>>, %arg4: memref<5x128x256xbf16, #tpu.memory_space<vmem>>, %arg5: memref<1x256xf32, #tpu.memory_space<vmem>>, %arg6: memref<512x128xbf16, #tpu.memory_space<vmem>>, %arg7: memref<1x128xf32, #tpu.memory_space<vmem>>, %arg8: memref<128x128xbf16, #tpu.memory_space<vmem>>, %arg9: memref<1x128xf32, #tpu.memory_space<vmem>>, %arg10: memref<8x128xf32, #tpu.memory_space<vmem>>) attributes {dimension_semantics = [#tpu.dimension_semantics<parallel>], iteration_bounds = array<i64: 1>, scalar_prefetch = 0 : i64, scratch_operands = 0 : i64, tpu.core_type = #tpu.core_type<tc>, window_params = [{transform_indices = @transform_0, window_bounds = array<i64: 28, 8, 32>}, {pipeline_mode = #tpu.pipeline_mode<synchronous>, transform_indices = @transform_1, window_bounds = array<i64: 5, 32, 256>}, {pipeline_mode = #tpu.pipeline_mode<synchronous>, transform_indices = @transform_2, window_bounds = array<i64: 1, 256>}, {pipeline_mode = #tpu.pipeline_mode<synchronous>, transform_indices = @transform_3, window_bounds = array<i64: 5, 128, 256>}, {pipeline_mode = #tpu.pipeline_mode<synchronous>, transform_indices = @transform_4, window_bounds = array<i64: 1, 256>}, {pipeline_mode = #tpu.pipeline_mode<synchronous>, transform_indices = @transform_5, window_bounds = array<i64: 512, 128>}, {pipeline_mode = #tpu.pipeline_mode<synchronous>, transform_indices = @transform_6, window_bounds = array<i64: 1, 128>}, {pipeline_mode = #tpu.pipeline_mode<synchronous>, transform_indices = @transform_7, window_bounds = array<i64: 128, 128>}, {pipeline_mode = #tpu.pipeline_mode<synchronous>, transform_indices = @transform_8, window_bounds = array<i64: 1, 128>}, {transform_indices = @transform_9, window_bounds = array<i64: 8, 128>}]} {
    %c0 = arith.constant 0 : index
    %c0_0 = arith.constant 0 : index
    %c0_1 = arith.constant 0 : index
    %0 = vector.load %arg1[%c0, %c0_0, %c0_1] : memref<28x8x32xf32, #tpu.memory_space<vmem>>, vector<28x8x32xf32>
    %1 = vector.extract_strided_slice %0 {offsets = [0, 0, 0], sizes = [24, 8, 32], strides = [1, 1, 1]} : vector<28x8x32xf32> to vector<24x8x32xf32>
    %2 = vector.shape_cast %1 : vector<24x8x32xf32> to vector<192x32xf32>
    %3 = arith.truncf %2 : vector<192x32xf32> to vector<192x32xbf16>
    %c0_2 = arith.constant 0 : index
    %c0_3 = arith.constant 0 : index
    %c0_4 = arith.constant 0 : index
    %4 = vector.load %arg2[%c0_2, %c0_3, %c0_4] : memref<5x32x256xbf16, #tpu.memory_space<vmem>>, vector<1x32x256xbf16>
    %5 = vector.shape_cast %4 : vector<1x32x256xbf16> to vector<32x256xbf16>
    %cst = arith.constant dense<0.000000e+00> : vector<192x256xf32>
    %6 = tpu.matmul %3, %5, %cst {dimension_numbers = #tpu.dot_dimension_numbers<[1], [0], [0], [1], [0, 0, 1, 1], [], []>} : vector<192x32xbf16>, vector<32x256xbf16>, vector<192x256xf32> -> vector<192x256xf32>
    %7 = vector.extract_strided_slice %0 {offsets = [1, 0, 0], sizes = [24, 8, 32], strides = [1, 1, 1]} : vector<28x8x32xf32> to vector<24x8x32xf32>
    %8 = vector.shape_cast %7 : vector<24x8x32xf32> to vector<192x32xf32>
    %9 = arith.truncf %8 : vector<192x32xf32> to vector<192x32xbf16>
    %c1 = arith.constant 1 : index
    %c0_5 = arith.constant 0 : index
    %c0_6 = arith.constant 0 : index
    %10 = vector.load %arg2[%c1, %c0_5, %c0_6] : memref<5x32x256xbf16, #tpu.memory_space<vmem>>, vector<1x32x256xbf16>
    %11 = vector.shape_cast %10 : vector<1x32x256xbf16> to vector<32x256xbf16>
    %cst_7 = arith.constant dense<0.000000e+00> : vector<192x256xf32>
    %12 = tpu.matmul %9, %11, %cst_7 {dimension_numbers = #tpu.dot_dimension_numbers<[1], [0], [0], [1], [0, 0, 1, 1], [], []>} : vector<192x32xbf16>, vector<32x256xbf16>, vector<192x256xf32> -> vector<192x256xf32>
    %13 = arith.addf %6, %12 : vector<192x256xf32>
    %14 = vector.extract_strided_slice %0 {offsets = [2, 0, 0], sizes = [24, 8, 32], strides = [1, 1, 1]} : vector<28x8x32xf32> to vector<24x8x32xf32>
    %15 = vector.shape_cast %14 : vector<24x8x32xf32> to vector<192x32xf32>
    %16 = arith.truncf %15 : vector<192x32xf32> to vector<192x32xbf16>
    %c2 = arith.constant 2 : index
    %c0_8 = arith.constant 0 : index
    %c0_9 = arith.constant 0 : index
    %17 = vector.load %arg2[%c2, %c0_8, %c0_9] : memref<5x32x256xbf16, #tpu.memory_space<vmem>>, vector<1x32x256xbf16>
    %18 = vector.shape_cast %17 : vector<1x32x256xbf16> to vector<32x256xbf16>
    %cst_10 = arith.constant dense<0.000000e+00> : vector<192x256xf32>
    %19 = tpu.matmul %16, %18, %cst_10 {dimension_numbers = #tpu.dot_dimension_numbers<[1], [0], [0], [1], [0, 0, 1, 1], [], []>} : vector<192x32xbf16>, vector<32x256xbf16>, vector<192x256xf32> -> vector<192x256xf32>
    %20 = arith.addf %13, %19 : vector<192x256xf32>
    %21 = vector.extract_strided_slice %0 {offsets = [3, 0, 0], sizes = [24, 8, 32], strides = [1, 1, 1]} : vector<28x8x32xf32> to vector<24x8x32xf32>
    %22 = vector.shape_cast %21 : vector<24x8x32xf32> to vector<192x32xf32>
    %23 = arith.truncf %22 : vector<192x32xf32> to vector<192x32xbf16>
    %c3 = arith.constant 3 : index
    %c0_11 = arith.constant 0 : index
    %c0_12 = arith.constant 0 : index
    %24 = vector.load %arg2[%c3, %c0_11, %c0_12] : memref<5x32x256xbf16, #tpu.memory_space<vmem>>, vector<1x32x256xbf16>
    %25 = vector.shape_cast %24 : vector<1x32x256xbf16> to vector<32x256xbf16>
    %cst_13 = arith.constant dense<0.000000e+00> : vector<192x256xf32>
    %26 = tpu.matmul %23, %25, %cst_13 {dimension_numbers = #tpu.dot_dimension_numbers<[1], [0], [0], [1], [0, 0, 1, 1], [], []>} : vector<192x32xbf16>, vector<32x256xbf16>, vector<192x256xf32> -> vector<192x256xf32>
    %27 = arith.addf %20, %26 : vector<192x256xf32>
    %28 = vector.extract_strided_slice %0 {offsets = [4, 0, 0], sizes = [24, 8, 32], strides = [1, 1, 1]} : vector<28x8x32xf32> to vector<24x8x32xf32>
    %29 = vector.shape_cast %28 : vector<24x8x32xf32> to vector<192x32xf32>
    %30 = arith.truncf %29 : vector<192x32xf32> to vector<192x32xbf16>
    %c4 = arith.constant 4 : index
    %c0_14 = arith.constant 0 : index
    %c0_15 = arith.constant 0 : index
    %31 = vector.load %arg2[%c4, %c0_14, %c0_15] : memref<5x32x256xbf16, #tpu.memory_space<vmem>>, vector<1x32x256xbf16>
    %32 = vector.shape_cast %31 : vector<1x32x256xbf16> to vector<32x256xbf16>
    %cst_16 = arith.constant dense<0.000000e+00> : vector<192x256xf32>
    %33 = tpu.matmul %30, %32, %cst_16 {dimension_numbers = #tpu.dot_dimension_numbers<[1], [0], [0], [1], [0, 0, 1, 1], [], []>} : vector<192x32xbf16>, vector<32x256xbf16>, vector<192x256xf32> -> vector<192x256xf32>
    %34 = arith.addf %27, %33 : vector<192x256xf32>
    %c0_17 = arith.constant 0 : index
    %c0_18 = arith.constant 0 : index
    %35 = vector.load %arg3[%c0_17, %c0_18] : memref<1x256xf32, #tpu.memory_space<vmem>>, vector<1x256xf32>
    %36 = vector.broadcast %35 : vector<1x256xf32> to vector<192x256xf32>
    %37 = arith.addf %34, %36 : vector<192x256xf32>
    %cst_19 = arith.constant 0.000000e+00 : f32
    %38 = vector.broadcast %cst_19 : f32 to vector<192x256xf32>
    %39 = arith.maximumf %37, %38 : vector<192x256xf32>
    %40 = vector.shape_cast %39 : vector<192x256xf32> to vector<12x2x8x256xf32>
    %41 = vector.extract_strided_slice %40 {offsets = [0, 0, 0, 0], sizes = [12, 1, 8, 256], strides = [1, 1, 1, 1]} : vector<12x2x8x256xf32> to vector<12x1x8x256xf32>
    %42 = vector.shape_cast %41 : vector<12x1x8x256xf32> to vector<12x8x256xf32>
    %43 = vector.extract_strided_slice %40 {offsets = [0, 1, 0, 0], sizes = [12, 1, 8, 256], strides = [1, 1, 1, 1]} : vector<12x2x8x256xf32> to vector<12x1x8x256xf32>
    %44 = vector.shape_cast %43 : vector<12x1x8x256xf32> to vector<12x8x256xf32>
    %45 = arith.maximumf %42, %44 : vector<12x8x256xf32>
    %46 = vector.extract_strided_slice %45 {offsets = [0, 0, 0], sizes = [12, 8, 128], strides = [1, 1, 1]} : vector<12x8x256xf32> to vector<12x8x128xf32>
    %47 = vector.extract_strided_slice %45 {offsets = [0, 0, 128], sizes = [12, 8, 128], strides = [1, 1, 1]} : vector<12x8x256xf32> to vector<12x8x128xf32>
    %48 = arith.maximumf %46, %47 : vector<12x8x128xf32>
    %49 = vector.extract_strided_slice %48 {offsets = [0, 0, 0], sizes = [8, 8, 128], strides = [1, 1, 1]} : vector<12x8x128xf32> to vector<8x8x128xf32>
    %50 = vector.shape_cast %49 : vector<8x8x128xf32> to vector<64x128xf32>
    %51 = arith.truncf %50 : vector<64x128xf32> to vector<64x128xbf16>
    %c0_20 = arith.constant 0 : index
    %c0_21 = arith.constant 0 : index
    %c0_22 = arith.constant 0 : index
    %52 = vector.load %arg4[%c0_20, %c0_21, %c0_22] : memref<5x128x256xbf16, #tpu.memory_space<vmem>>, vector<1x128x256xbf16>
    %53 = vector.shape_cast %52 : vector<1x128x256xbf16> to vector<128x256xbf16>
    %cst_23 = arith.constant dense<0.000000e+00> : vector<64x256xf32>
    %54 = tpu.matmul %51, %53, %cst_23 {dimension_numbers = #tpu.dot_dimension_numbers<[1], [0], [0], [1], [0, 0, 1, 1], [], []>} : vector<64x128xbf16>, vector<128x256xbf16>, vector<64x256xf32> -> vector<64x256xf32>
    %55 = vector.extract_strided_slice %48 {offsets = [1, 0, 0], sizes = [8, 8, 128], strides = [1, 1, 1]} : vector<12x8x128xf32> to vector<8x8x128xf32>
    %56 = vector.shape_cast %55 : vector<8x8x128xf32> to vector<64x128xf32>
    %57 = arith.truncf %56 : vector<64x128xf32> to vector<64x128xbf16>
    %c1_24 = arith.constant 1 : index
    %c0_25 = arith.constant 0 : index
    %c0_26 = arith.constant 0 : index
    %58 = vector.load %arg4[%c1_24, %c0_25, %c0_26] : memref<5x128x256xbf16, #tpu.memory_space<vmem>>, vector<1x128x256xbf16>
    %59 = vector.shape_cast %58 : vector<1x128x256xbf16> to vector<128x256xbf16>
    %cst_27 = arith.constant dense<0.000000e+00> : vector<64x256xf32>
    %60 = tpu.matmul %57, %59, %cst_27 {dimension_numbers = #tpu.dot_dimension_numbers<[1], [0], [0], [1], [0, 0, 1, 1], [], []>} : vector<64x128xbf16>, vector<128x256xbf16>, vector<64x256xf32> -> vector<64x256xf32>
    %61 = arith.addf %54, %60 : vector<64x256xf32>
    %62 = vector.extract_strided_slice %48 {offsets = [2, 0, 0], sizes = [8, 8, 128], strides = [1, 1, 1]} : vector<12x8x128xf32> to vector<8x8x128xf32>
    %63 = vector.shape_cast %62 : vector<8x8x128xf32> to vector<64x128xf32>
    %64 = arith.truncf %63 : vector<64x128xf32> to vector<64x128xbf16>
    %c2_28 = arith.constant 2 : index
    %c0_29 = arith.constant 0 : index
    %c0_30 = arith.constant 0 : index
    %65 = vector.load %arg4[%c2_28, %c0_29, %c0_30] : memref<5x128x256xbf16, #tpu.memory_space<vmem>>, vector<1x128x256xbf16>
    %66 = vector.shape_cast %65 : vector<1x128x256xbf16> to vector<128x256xbf16>
    %cst_31 = arith.constant dense<0.000000e+00> : vector<64x256xf32>
    %67 = tpu.matmul %64, %66, %cst_31 {dimension_numbers = #tpu.dot_dimension_numbers<[1], [0], [0], [1], [0, 0, 1, 1], [], []>} : vector<64x128xbf16>, vector<128x256xbf16>, vector<64x256xf32> -> vector<64x256xf32>
    %68 = arith.addf %61, %67 : vector<64x256xf32>
    %69 = vector.extract_strided_slice %48 {offsets = [3, 0, 0], sizes = [8, 8, 128], strides = [1, 1, 1]} : vector<12x8x128xf32> to vector<8x8x128xf32>
    %70 = vector.shape_cast %69 : vector<8x8x128xf32> to vector<64x128xf32>
    %71 = arith.truncf %70 : vector<64x128xf32> to vector<64x128xbf16>
    %c3_32 = arith.constant 3 : index
    %c0_33 = arith.constant 0 : index
    %c0_34 = arith.constant 0 : index
    %72 = vector.load %arg4[%c3_32, %c0_33, %c0_34] : memref<5x128x256xbf16, #tpu.memory_space<vmem>>, vector<1x128x256xbf16>
    %73 = vector.shape_cast %72 : vector<1x128x256xbf16> to vector<128x256xbf16>
    %cst_35 = arith.constant dense<0.000000e+00> : vector<64x256xf32>
    %74 = tpu.matmul %71, %73, %cst_35 {dimension_numbers = #tpu.dot_dimension_numbers<[1], [0], [0], [1], [0, 0, 1, 1], [], []>} : vector<64x128xbf16>, vector<128x256xbf16>, vector<64x256xf32> -> vector<64x256xf32>
    %75 = arith.addf %68, %74 : vector<64x256xf32>
    %76 = vector.extract_strided_slice %48 {offsets = [4, 0, 0], sizes = [8, 8, 128], strides = [1, 1, 1]} : vector<12x8x128xf32> to vector<8x8x128xf32>
    %77 = vector.shape_cast %76 : vector<8x8x128xf32> to vector<64x128xf32>
    %78 = arith.truncf %77 : vector<64x128xf32> to vector<64x128xbf16>
    %c4_36 = arith.constant 4 : index
    %c0_37 = arith.constant 0 : index
    %c0_38 = arith.constant 0 : index
    %79 = vector.load %arg4[%c4_36, %c0_37, %c0_38] : memref<5x128x256xbf16, #tpu.memory_space<vmem>>, vector<1x128x256xbf16>
    %80 = vector.shape_cast %79 : vector<1x128x256xbf16> to vector<128x256xbf16>
    %cst_39 = arith.constant dense<0.000000e+00> : vector<64x256xf32>
    %81 = tpu.matmul %78, %80, %cst_39 {dimension_numbers = #tpu.dot_dimension_numbers<[1], [0], [0], [1], [0, 0, 1, 1], [], []>} : vector<64x128xbf16>, vector<128x256xbf16>, vector<64x256xf32> -> vector<64x256xf32>
    %82 = arith.addf %75, %81 : vector<64x256xf32>
    %c0_40 = arith.constant 0 : index
    %c0_41 = arith.constant 0 : index
    %83 = vector.load %arg5[%c0_40, %c0_41] : memref<1x256xf32, #tpu.memory_space<vmem>>, vector<1x256xf32>
    %84 = vector.broadcast %83 : vector<1x256xf32> to vector<64x256xf32>
    %85 = arith.addf %82, %84 : vector<64x256xf32>
    %cst_42 = arith.constant 0.000000e+00 : f32
    %86 = vector.broadcast %cst_42 : f32 to vector<64x256xf32>
    %87 = arith.maximumf %85, %86 : vector<64x256xf32>
    %88 = vector.shape_cast %87 : vector<64x256xf32> to vector<4x2x8x256xf32>
    %89 = vector.extract_strided_slice %88 {offsets = [0, 0, 0, 0], sizes = [4, 1, 8, 256], strides = [1, 1, 1, 1]} : vector<4x2x8x256xf32> to vector<4x1x8x256xf32>
    %90 = vector.shape_cast %89 : vector<4x1x8x256xf32> to vector<4x8x256xf32>
    %91 = vector.extract_strided_slice %88 {offsets = [0, 1, 0, 0], sizes = [4, 1, 8, 256], strides = [1, 1, 1, 1]} : vector<4x2x8x256xf32> to vector<4x1x8x256xf32>
    %92 = vector.shape_cast %91 : vector<4x1x8x256xf32> to vector<4x8x256xf32>
    %93 = arith.maximumf %90, %92 : vector<4x8x256xf32>
    %94 = vector.extract_strided_slice %93 {offsets = [0, 0, 0], sizes = [4, 8, 128], strides = [1, 1, 1]} : vector<4x8x256xf32> to vector<4x8x128xf32>
    %95 = vector.extract_strided_slice %93 {offsets = [0, 0, 128], sizes = [4, 8, 128], strides = [1, 1, 1]} : vector<4x8x256xf32> to vector<4x8x128xf32>
    %96 = arith.maximumf %94, %95 : vector<4x8x128xf32>
    %97 = vector.extract_strided_slice %96 {offsets = [0, 0, 0], sizes = [1, 8, 128], strides = [1, 1, 1]} : vector<4x8x128xf32> to vector<1x8x128xf32>
    %98 = vector.shape_cast %97 : vector<1x8x128xf32> to vector<8x128xf32>
    %99 = vector.extract_strided_slice %96 {offsets = [1, 0, 0], sizes = [1, 8, 128], strides = [1, 1, 1]} : vector<4x8x128xf32> to vector<1x8x128xf32>
    %100 = vector.shape_cast %99 : vector<1x8x128xf32> to vector<8x128xf32>
    %101 = vector.extract_strided_slice %96 {offsets = [2, 0, 0], sizes = [1, 8, 128], strides = [1, 1, 1]} : vector<4x8x128xf32> to vector<1x8x128xf32>
    %102 = vector.shape_cast %101 : vector<1x8x128xf32> to vector<8x128xf32>
    %103 = vector.extract_strided_slice %96 {offsets = [3, 0, 0], sizes = [1, 8, 128], strides = [1, 1, 1]} : vector<4x8x128xf32> to vector<1x8x128xf32>
    %104 = vector.shape_cast %103 : vector<1x8x128xf32> to vector<8x128xf32>
    %105 = tpu.concatenate %98, %100, %102, %104 in 1 : vector<8x128xf32>, vector<8x128xf32>, vector<8x128xf32>, vector<8x128xf32> -> vector<8x512xf32>
    %106 = arith.truncf %105 : vector<8x512xf32> to vector<8x512xbf16>
    %c0_43 = arith.constant 0 : index
    %c0_44 = arith.constant 0 : index
    %107 = vector.load %arg6[%c0_43, %c0_44] : memref<512x128xbf16, #tpu.memory_space<vmem>>, vector<512x128xbf16>
    %cst_45 = arith.constant dense<0.000000e+00> : vector<8x128xf32>
    %108 = tpu.matmul %106, %107, %cst_45 {dimension_numbers = #tpu.dot_dimension_numbers<[1], [0], [0], [1], [0, 0, 1, 1], [], []>} : vector<8x512xbf16>, vector<512x128xbf16>, vector<8x128xf32> -> vector<8x128xf32>
    %c0_46 = arith.constant 0 : index
    %c0_47 = arith.constant 0 : index
    %109 = vector.load %arg7[%c0_46, %c0_47] : memref<1x128xf32, #tpu.memory_space<vmem>>, vector<1x128xf32>
    %110 = vector.broadcast %109 : vector<1x128xf32> to vector<8x128xf32>
    %111 = arith.addf %108, %110 : vector<8x128xf32>
    %cst_48 = arith.constant 0.000000e+00 : f32
    %112 = vector.broadcast %cst_48 : f32 to vector<8x128xf32>
    %113 = arith.maximumf %111, %112 : vector<8x128xf32>
    %114 = arith.truncf %113 : vector<8x128xf32> to vector<8x128xbf16>
    %c0_49 = arith.constant 0 : index
    %c0_50 = arith.constant 0 : index
    %115 = vector.load %arg8[%c0_49, %c0_50] : memref<128x128xbf16, #tpu.memory_space<vmem>>, vector<128x128xbf16>
    %cst_51 = arith.constant dense<0.000000e+00> : vector<8x128xf32>
    %116 = tpu.matmul %114, %115, %cst_51 {dimension_numbers = #tpu.dot_dimension_numbers<[1], [0], [0], [1], [0, 0, 1, 1], [], []>} : vector<8x128xbf16>, vector<128x128xbf16>, vector<8x128xf32> -> vector<8x128xf32>
    %c0_52 = arith.constant 0 : index
    %c0_53 = arith.constant 0 : index
    %117 = vector.load %arg9[%c0_52, %c0_53] : memref<1x128xf32, #tpu.memory_space<vmem>>, vector<1x128xf32>
    %118 = vector.broadcast %117 : vector<1x128xf32> to vector<8x128xf32>
    %119 = arith.addf %116, %118 : vector<8x128xf32>
    %cst_54 = arith.constant 0.000000e+00 : f32
    %120 = vector.broadcast %cst_54 : f32 to vector<8x128xf32>
    %121 = arith.maximumf %119, %120 : vector<8x128xf32>
    %c0_55 = arith.constant 0 : index
    %c0_56 = arith.constant 0 : index
    %122 = vector.load %arg10[%c0_55, %c0_56] : memref<8x128xf32, #tpu.memory_space<vmem>>, vector<8x128xf32>
    tpu.vector_store %arg10[%c0_55, %c0_56], %121 {strides = array<i32>} : memref<8x128xf32, #tpu.memory_space<vmem>>, vector<8x128xf32>,
    return
  }
  func.func @transform_0(%arg0: i32) -> (i32, i32, i32) {
    %c0_i32 = arith.constant 0 : i32
    %c0_i32_0 = arith.constant 0 : i32
    %c0_i32_1 = arith.constant 0 : i32
    return %c0_i32, %arg0, %c0_i32_0 : i32, i32, i32
  }
  func.func @transform_1(%arg0: i32) -> (i32, i32, i32) {
    %c0_i32 = arith.constant 0 : i32
    %c0_i32_0 = arith.constant 0 : i32
    %c0_i32_1 = arith.constant 0 : i32
    %c0_i32_2 = arith.constant 0 : i32
    return %c0_i32, %c0_i32_0, %c0_i32_1 : i32, i32, i32
  }
  func.func @transform_2(%arg0: i32) -> (i32, i32) {
    %c0_i32 = arith.constant 0 : i32
    %c0_i32_0 = arith.constant 0 : i32
    %c0_i32_1 = arith.constant 0 : i32
    return %c0_i32, %c0_i32_0 : i32, i32
  }
  func.func @transform_3(%arg0: i32) -> (i32, i32, i32) {
    %c0_i32 = arith.constant 0 : i32
    %c0_i32_0 = arith.constant 0 : i32
    %c0_i32_1 = arith.constant 0 : i32
    %c0_i32_2 = arith.constant 0 : i32
    return %c0_i32, %c0_i32_0, %c0_i32_1 : i32, i32, i32
  }
  func.func @transform_4(%arg0: i32) -> (i32, i32) {
    %c0_i32 = arith.constant 0 : i32
    %c0_i32_0 = arith.constant 0 : i32
    %c0_i32_1 = arith.constant 0 : i32
    return %c0_i32, %c0_i32_0 : i32, i32
  }
  func.func @transform_5(%arg0: i32) -> (i32, i32) {
    %c0_i32 = arith.constant 0 : i32
    %c0_i32_0 = arith.constant 0 : i32
    %c0_i32_1 = arith.constant 0 : i32
    return %c0_i32, %c0_i32_0 : i32, i32
  }
  func.func @transform_6(%arg0: i32) -> (i32, i32) {
    %c0_i32 = arith.constant 0 : i32
    %c0_i32_0 = arith.constant 0 : i32
    %c0_i32_1 = arith.constant 0 : i32
    return %c0_i32, %c0_i32_0 : i32, i32
  }
  func.func @transform_7(%arg0: i32) -> (i32, i32) {
    %c0_i32 = arith.constant 0 : i32
    %c0_i32_0 = arith.constant 0 : i32
    %c0_i32_1 = arith.constant 0 : i32
    return %c0_i32, %c0_i32_0 : i32, i32
  }
  func.func @transform_8(%arg0: i32) -> (i32, i32) {
    %c0_i32 = arith.constant 0 : i32
    %c0_i32_0 = arith.constant 0 : i32
    %c0_i32_1 = arith.constant 0 : i32
    return %c0_i32, %c0_i32_0 : i32, i32
  }
  func.func @transform_9(%arg0: i32) -> (i32, i32) {
    %c0_i32 = arith.constant 0 : i32
    %c0_i32_0 = arith.constant 0 : i32
    return %arg0, %c0_i32 : i32, i32
  }
}

</mosaic_0001>

<llo_original>
// kernel: tile.18
$region0: #{tile.18}
  #allocation0 [shape = 's32[1]{0}', space=sflag, size = 0x4, scoped, tag = 'scoped memory for tile.18']
  %s0 = inlined_call_operand.vmem [shape: f32[128], index: 0, kind: input, shape index: {}]
  %s1 = inlined_call_operand.vmem [shape: f32[2,128], index: 1, kind: output, shape index: {}]
  // Predicated region
  $region2: #{tile.18} parent=0 // pred_check
    _
  $region3: #{tile.18} parent=0 // pred_check_branch
    %3 = sbr.rel (0) target = $region5
  $region4: #{tile.18} parent=0 // pred_region
    _
  $region5: #{tile.18} parent=0 // pred_fallthru
    _
  %v4 = vld [vmem:[%s0] ss:$0 sm:$0xff]
  %5 = vst [vmem:[%s1] sm:$0x3] %v4

// kernel: mnist_convnet_forward.1
$region0: #{mnist_convnet_forward.1}
  #allocation0 [shape = 'u32[]', space=smem, size = 0x4, offset = 0x4, fixed_abs, tag = 'smem constant byte address 0x4 - core index']
  #allocation1 [shape = 'u32[72,128]{1,0:T(1,128)}', space=vmem, size = 0x9000, scoped, tag = 'internal scratch']
  %s0 = inlined_call_operand.vmem [shape: f32[28,8,32], index: 0, kind: input, shape index: {}]
  %s1 = inlined_call_operand.vmem [shape: bf16[5,32,256], index: 1, kind: input, shape index: {}]
  %s2 = inlined_call_operand.vmem [shape: f32[1,256], index: 2, kind: input, shape index: {}]
  %s3 = inlined_call_operand.vmem [shape: bf16[5,128,256], index: 3, kind: input, shape index: {}]
  %s4 = inlined_call_operand.vmem [shape: f32[1,256], index: 4, kind: input, shape index: {}]
  %s5 = inlined_call_operand.vmem [shape: bf16[512,128], index: 5, kind: input, shape index: {}]
  %s6 = inlined_call_operand.vmem [shape: f32[1,128], index: 6, kind: input, shape index: {}]
  %s7 = inlined_call_operand.vmem [shape: bf16[128,128], index: 7, kind: input, shape index: {}]
  %s8 = inlined_call_operand.vmem [shape: f32[1,128], index: 8, kind: input, shape index: {}]
  %s9 = inlined_call_operand.vmem [shape: f32[8,128], index: 9, kind: output, shape index: {}]
  %s10 = sld [smem:[#allocation0]]
  $region46: #{mnist_convnet_forward.1} parent=0
    _
  %s12 = ssub.s32 1, %s10
  %s13 = scalar_select 0, %s12, %s10
  // Predicated region
  $region2: #{mnist_convnet_forward.1} parent=0 // pred_check
    _
  $region3: #{mnist_convnet_forward.1} parent=0 // pred_check_branch
    %15 = sbr.rel (0) target = $region5
  $region4: #{mnist_convnet_forward.1} parent=0 // pred_region
    _
  $region5: #{mnist_convnet_forward.1} parent=0 // pred_fallthru
    _
  // Predicated region
  $region6: #{mnist_convnet_forward.1} parent=0 // pred_check
    _
  $region7: #{mnist_convnet_forward.1} parent=0 // pred_check_branch
    %17 = sbr.rel (0) target = $region9
  $region8: #{mnist_convnet_forward.1} parent=0 // pred_region
    _
  $region9: #{mnist_convnet_forward.1} parent=0 // pred_fallthru
    _
  // Predicated region
  $region10: #{mnist_convnet_forward.1} parent=0 // pred_check
    _
  $region11: #{mnist_convnet_forward.1} parent=0 // pred_check_branch
    %19 = sbr.rel (0) target = $region13
  $region12: #{mnist_convnet_forward.1} parent=0 // pred_region
    _
  $region13: #{mnist_convnet_forward.1} parent=0 // pred_fallthru
    _
  // Predicated region
  $region14: #{mnist_convnet_forward.1} parent=0 // pred_check
    _
  $region15: #{mnist_convnet_forward.1} parent=0 // pred_check_branch
    %21 = sbr.rel (0) target = $region17
  $region16: #{mnist_convnet_forward.1} parent=0 // pred_region
    _
  $region17: #{mnist_convnet_forward.1} parent=0 // pred_fallthru
    _
  // Predicated region
  $region18: #{mnist_convnet_forward.1} parent=0 // pred_check
    _
  $region19: #{mnist_convnet_forward.1} parent=0 // pred_check_branch
    %23 = sbr.rel (0) target = $region21
  $region20: #{mnist_convnet_forward.1} parent=0 // pred_region
    _
  $region21: #{mnist_convnet_forward.1} parent=0 // pred_fallthru
    _
  // Predicated region
  $region22: #{mnist_convnet_forward.1} parent=0 // pred_check
    _
  $region23: #{mnist_convnet_forward.1} parent=0 // pred_check_branch
    %25 = sbr.rel (0) target = $region25
  $region24: #{mnist_convnet_forward.1} parent=0 // pred_region
    _
  $region25: #{mnist_convnet_forward.1} parent=0 // pred_fallthru
    _
  // Predicated region
  $region26: #{mnist_convnet_forward.1} parent=0 // pred_check
    _
  $region27: #{mnist_convnet_forward.1} parent=0 // pred_check_branch
    %27 = sbr.rel (0) target = $region29
  $region28: #{mnist_convnet_forward.1} parent=0 // pred_region
    _
  $region29: #{mnist_convnet_forward.1} parent=0 // pred_fallthru
    _
  // Predicated region
  $region30: #{mnist_convnet_forward.1} parent=0 // pred_check
    _
  $region31: #{mnist_convnet_forward.1} parent=0 // pred_check_branch
    %29 = sbr.rel (0) target = $region33
  $region32: #{mnist_convnet_forward.1} parent=0 // pred_region
    _
  $region33: #{mnist_convnet_forward.1} parent=0 // pred_fallthru
    _
  // Predicated region
  $region34: #{mnist_convnet_forward.1} parent=0 // pred_check
    _
  $region35: #{mnist_convnet_forward.1} parent=0 // pred_check_branch
    %31 = sbr.rel (0) target = $region37
  $region36: #{mnist_convnet_forward.1} parent=0 // pred_region
    _
  $region37: #{mnist_convnet_forward.1} parent=0 // pred_fallthru
    _
  %v33 = vld [vmem:[%s0] sm:$0xff]
  %v34 = vld [vmem:[%s0 + $0x8] sm:$0xff]
  %v35 = vld [vmem:[%s0 + $0x10] sm:$0xff]
  %v36 = vld [vmem:[%s0 + $0x18] sm:$0xff]
  %v37 = vld [vmem:[%s0 + $0x20] sm:$0xff]
  %v38 = vld [vmem:[%s0 + $0x28] sm:$0xff]
  %v39 = vld [vmem:[%s0 + $0x30] sm:$0xff]
  %v40 = vld [vmem:[%s0 + $0x38] sm:$0xff]
  %v41 = vld [vmem:[%s0 + $0x40] sm:$0xff]
  %v42 = vld [vmem:[%s0 + $0x48] sm:$0xff]
  %v43 = vld [vmem:[%s0 + $0x50] sm:$0xff]
  %v44 = vld [vmem:[%s0 + $0x58] sm:$0xff]
  %v45 = vld [vmem:[%s0 + $0x60] sm:$0xff]
  %v46 = vld [vmem:[%s0 + $0x68] sm:$0xff]
  %v47 = vld [vmem:[%s0 + $0x70] sm:$0xff]
  %v48 = vld [vmem:[%s0 + $0x78] sm:$0xff]
  %v49 = vld [vmem:[%s0 + $0x80] sm:$0xff]
  %v50 = vld [vmem:[%s0 + $0x88] sm:$0xff]
  %v51 = vld [vmem:[%s0 + $0x90] sm:$0xff]
  %v52 = vld [vmem:[%s0 + $0x98] sm:$0xff]
  %v53 = vld [vmem:[%s0 + $0xa0] sm:$0xff]
  %v54 = vld [vmem:[%s0 + $0xa8] sm:$0xff]
  %v55 = vld [vmem:[%s0 + $0xb0] sm:$0xff]
  %v56 = vld [vmem:[%s0 + $0xb8] sm:$0xff]
  %v57 = vld [vmem:[%s0 + $0xc0] sm:$0xff]
  %v58 = vld [vmem:[%s0 + $0xc8] sm:$0xff]
  %v59 = vld [vmem:[%s0 + $0xd0] sm:$0xff]
  %v60 = vld [vmem:[%s0 + $0xd8] sm:$0xff]
  %v61 = vpack.c.bf16 %v34, %v33
  %v62 = vpack.c.bf16 %v36, %v35
  %v63 = vpack.c.bf16 %v38, %v37
  %v64 = vpack.c.bf16 %v40, %v39
  %v65 = vpack.c.bf16 %v42, %v41
  %v66 = vpack.c.bf16 %v44, %v43
  %v67 = vpack.c.bf16 %v46, %v45
  %v68 = vpack.c.bf16 %v48, %v47
  %v69 = vpack.c.bf16 %v50, %v49
  %v70 = vpack.c.bf16 %v52, %v51
  %v71 = vpack.c.bf16 %v54, %v53
  %v72 = vpack.c.bf16 %v56, %v55
  %v73 = vld [vmem:[%s1] sm:$0xff]
  %v74 = vld [vmem:[%s1 + $0x8] sm:$0xff]
  %v75 = vld [vmem:[%s1 + $0x10] sm:$0xff]
  %v76 = vld [vmem:[%s1 + $0x18] sm:$0xff]
  %v77 = vpack.c.bf16 %v35, %v34
  %v78 = vpack.c.bf16 %v37, %v36
  %v79 = vpack.c.bf16 %v39, %v38
  %v80 = vpack.c.bf16 %v41, %v40
  %v81 = vpack.c.bf16 %v43, %v42
  %v82 = vpack.c.bf16 %v45, %v44
  %v83 = vpack.c.bf16 %v47, %v46
  %v84 = vpack.c.bf16 %v49, %v48
  %v85 = vpack.c.bf16 %v51, %v50
  %v86 = vpack.c.bf16 %v53, %v52
  %v87 = vpack.c.bf16 %v55, %v54
  %v88 = vpack.c.bf16 %v57, %v56
  %s89 = scalar_lea.vmem %s1, 32
  %v90 = vld [vmem:[%s89] sm:$0xff]
  %v91 = vld [vmem:[%s89 + $0x8] sm:$0xff]
  %v92 = vld [vmem:[%s89 + $0x10] sm:$0xff]
  %v93 = vld [vmem:[%s89 + $0x18] sm:$0xff]
  %v98 = vunpack.c.l.b16 %v90
  %v99 = vunpack.c.h.b16 %v90
  %v100 = vunpack.c.l.b16 %v91
  %v101 = vunpack.c.h.b16 %v91
  %v102 = vunpack.c.l.b16 %v92
  %v103 = vunpack.c.h.b16 %v92
  %v104 = vunpack.c.l.b16 %v93
  %v105 = vunpack.c.h.b16 %v93
  %v106 = vpack.c.b16 %v100, %v98
  %v107 = vpack.c.b16 %v101, %v99
  %v108 = vpack.c.b16 %v104, %v102
  %v109 = vpack.c.b16 %v105, %v103
  %vm114 = vcmask 261120
  %v116 = vsel %vm114, %v77, 0
  %v119 = vsel %vm114, %v78, 0
  %v122 = vsel %vm114, %v79, 0
  %v125 = vsel %vm114, %v80, 0
  %v128 = vsel %vm114, %v81, 0
  %v131 = vsel %vm114, %v82, 0
  %v134 = vsel %vm114, %v83, 0
  %v137 = vsel %vm114, %v84, 0
  %v140 = vsel %vm114, %v85, 0
  %v143 = vsel %vm114, %v86, 0
  %v146 = vsel %vm114, %v87, 0
  %v149 = vsel %vm114, %v88, 0
  %151 = vmatpush.bf16.msra.mxu0 0
  %152 = vmatpush.bf16.msra.mxu0 0
  %153 = vmatpush.bf16.msra.mxu0 0
  %154 = vmatpush.bf16.msra.mxu0 0
  %155 = vmatpush.bf16.msra.mxu0 0
  %156 = vmatpush.bf16.msra.mxu0 0
  %157 = vmatpush.bf16.msra.mxu0 %v108
  %158 = vmatpush.bf16.msra.mxu0 %v106
  %159 = vmatmul.bf16.gmra.mxu0 %v116
  %v160 = vpop.f32.mrf.mxu0
  %v161 = vadd.f32 0.0, %v160
  %v162 = vpop.f32.mrf.mxu0
  %v163 = vadd.f32 0.0, %v162
  %164 = vmatmul.bf16.gmra.mxu0 %v119
  %v165 = vpop.f32.mrf.mxu0
  %v166 = vadd.f32 0.0, %v165
  %v167 = vpop.f32.mrf.mxu0
  %v168 = vadd.f32 0.0, %v167
  %169 = vmatmul.bf16.gmra.mxu0 %v122
  %v170 = vpop.f32.mrf.mxu0
  %v171 = vadd.f32 0.0, %v170
  %v172 = vpop.f32.mrf.mxu0
  %v173 = vadd.f32 0.0, %v172
  %174 = vmatmul.bf16.gmra.mxu0 %v125
  %v175 = vpop.f32.mrf.mxu0
  %v176 = vadd.f32 0.0, %v175
  %v177 = vpop.f32.mrf.mxu0
  %v178 = vadd.f32 0.0, %v177
  %179 = vmatmul.bf16.gmra.mxu0 %v128
  %v180 = vpop.f32.mrf.mxu0
  %v181 = vadd.f32 0.0, %v180
  %v182 = vpop.f32.mrf.mxu0
  %v183 = vadd.f32 0.0, %v182
  %184 = vmatmul.bf16.gmra.mxu0 %v131
  %v185 = vpop.f32.mrf.mxu0
  %v186 = vadd.f32 0.0, %v185
  %v187 = vpop.f32.mrf.mxu0
  %v188 = vadd.f32 0.0, %v187
  %189 = vmatmul.bf16.gmra.mxu0 %v134
  %v190 = vpop.f32.mrf.mxu0
  %v191 = vadd.f32 0.0, %v190
  %v192 = vpop.f32.mrf.mxu0
  %v193 = vadd.f32 0.0, %v192
  %194 = vmatmul.bf16.gmra.mxu0 %v137
  %v195 = vpop.f32.mrf.mxu0
  %v196 = vadd.f32 0.0, %v195
  %v197 = vpop.f32.mrf.mxu0
  %v198 = vadd.f32 0.0, %v197
  %199 = vmatmul.bf16.gmra.mxu0 %v140
  %v200 = vpop.f32.mrf.mxu0
  %v201 = vadd.f32 0.0, %v200
  %v202 = vpop.f32.mrf.mxu0
  %v203 = vadd.f32 0.0, %v202
  %204 = vmatmul.bf16.gmra.mxu0 %v143
  %v205 = vpop.f32.mrf.mxu0
  %v206 = vadd.f32 0.0, %v205
  %v207 = vpop.f32.mrf.mxu0
  %v208 = vadd.f32 0.0, %v207
  %209 = vmatmul.bf16.gmra.mxu0 %v146
  %v210 = vpop.f32.mrf.mxu0
  %v211 = vadd.f32 0.0, %v210
  %v212 = vpop.f32.mrf.mxu0
  %v213 = vadd.f32 0.0, %v212
  %214 = vmatmul.bf16.gmra.mxu0 %v149
  %v215 = vpop.f32.mrf.mxu0
  %v216 = vadd.f32 0.0, %v215
  %v217 = vpop.f32.mrf.mxu0
  %v218 = vadd.f32 0.0, %v217
  %219 = vdwg.mxu0
  %220 = vmatpush.bf16.msra.mxu0 0
  %221 = vmatpush.bf16.msra.mxu0 0
  %222 = vmatpush.bf16.msra.mxu0 0
  %223 = vmatpush.bf16.msra.mxu0 0
  %224 = vmatpush.bf16.msra.mxu0 0
  %225 = vmatpush.bf16.msra.mxu0 0
  %226 = vmatpush.bf16.msra.mxu0 %v109
  %227 = vmatpush.bf16.msra.mxu0 %v107
  %228 = vmatmul.bf16.gmra.mxu0 %v116
  %v229 = vpop.f32.mrf.mxu0
  %v230 = vadd.f32 0.0, %v229
  %v231 = vpop.f32.mrf.mxu0
  %v232 = vadd.f32 0.0, %v231
  %233 = vmatmul.bf16.gmra.mxu0 %v119
  %v234 = vpop.f32.mrf.mxu0
  %v235 = vadd.f32 0.0, %v234
  %v236 = vpop.f32.mrf.mxu0
  %v237 = vadd.f32 0.0, %v236
  %238 = vmatmul.bf16.gmra.mxu0 %v122
  %v239 = vpop.f32.mrf.mxu0
  %v240 = vadd.f32 0.0, %v239
  %v241 = vpop.f32.mrf.mxu0
  %v242 = vadd.f32 0.0, %v241
  %243 = vmatmul.bf16.gmra.mxu0 %v125
  %v244 = vpop.f32.mrf.mxu0
  %v245 = vadd.f32 0.0, %v244
  %v246 = vpop.f32.mrf.mxu0
  %v247 = vadd.f32 0.0, %v246
  %248 = vmatmul.bf16.gmra.mxu0 %v128
  %v249 = vpop.f32.mrf.mxu0
  %v250 = vadd.f32 0.0, %v249
  %v251 = vpop.f32.mrf.mxu0
  %v252 = vadd.f32 0.0, %v251
  %253 = vmatmul.bf16.gmra.mxu0 %v131
  %v254 = vpop.f32.mrf.mxu0
  %v255 = vadd.f32 0.0, %v254
  %v256 = vpop.f32.mrf.mxu0
  %v257 = vadd.f32 0.0, %v256
  %258 = vmatmul.bf16.gmra.mxu0 %v134
  %v259 = vpop.f32.mrf.mxu0
  %v260 = vadd.f32 0.0, %v259
  %v261 = vpop.f32.mrf.mxu0
  %v262 = vadd.f32 0.0, %v261
  %263 = vmatmul.bf16.gmra.mxu0 %v137
  %v264 = vpop.f32.mrf.mxu0
  %v265 = vadd.f32 0.0, %v264
  %v266 = vpop.f32.mrf.mxu0
  %v267 = vadd.f32 0.0, %v266
  %268 = vmatmul.bf16.gmra.mxu0 %v140
  %v269 = vpop.f32.mrf.mxu0
  %v270 = vadd.f32 0.0, %v269
  %v271 = vpop.f32.mrf.mxu0
  %v272 = vadd.f32 0.0, %v271
  %273 = vmatmul.bf16.gmra.mxu0 %v143
  %v274 = vpop.f32.mrf.mxu0
  %v275 = vadd.f32 0.0, %v274
  %v276 = vpop.f32.mrf.mxu0
  %v277 = vadd.f32 0.0, %v276
  %278 = vmatmul.bf16.gmra.mxu0 %v146
  %v279 = vpop.f32.mrf.mxu0
  %v280 = vadd.f32 0.0, %v279
  %v281 = vpop.f32.mrf.mxu0
  %v282 = vadd.f32 0.0, %v281
  %283 = vmatmul.bf16.gmra.mxu0 %v149
  %v284 = vpop.f32.mrf.mxu0
  %v285 = vadd.f32 0.0, %v284
  %v286 = vpop.f32.mrf.mxu0
  %v287 = vadd.f32 0.0, %v286
  %288 = vdwg.mxu0
  %v293 = vunpack.c.l.b16 %v73
  %v294 = vunpack.c.h.b16 %v73
  %v295 = vunpack.c.l.b16 %v74
  %v296 = vunpack.c.h.b16 %v74
  %v297 = vunpack.c.l.b16 %v75
  %v298 = vunpack.c.h.b16 %v75
  %v299 = vunpack.c.l.b16 %v76
  %v300 = vunpack.c.h.b16 %v76
  %v301 = vpack.c.b16 %v295, %v293
  %v302 = vpack.c.b16 %v296, %v294
  %v303 = vpack.c.b16 %v299, %v297
  %v304 = vpack.c.b16 %v300, %v298
  %v310 = vsel %vm114, %v61, 0
  %v313 = vsel %vm114, %v62, 0
  %v316 = vsel %vm114, %v63, 0
  %v319 = vsel %vm114, %v64, 0
  %v322 = vsel %vm114, %v65, 0
  %v325 = vsel %vm114, %v66, 0
  %v328 = vsel %vm114, %v67, 0
  %v331 = vsel %vm114, %v68, 0
  %v334 = vsel %vm114, %v69, 0
  %v337 = vsel %vm114, %v70, 0
  %v340 = vsel %vm114, %v71, 0
  %v343 = vsel %vm114, %v72, 0
  %345 = vmatpush.bf16.msra.mxu0 0
  %346 = vmatpush.bf16.msra.mxu0 0
  %347 = vmatpush.bf16.msra.mxu0 0
  %348 = vmatpush.bf16.msra.mxu0 0
  %349 = vmatpush.bf16.msra.mxu0 0
  %350 = vmatpush.bf16.msra.mxu0 0
  %351 = vmatpush.bf16.msra.mxu0 %v303
  %352 = vmatpush.bf16.msra.mxu0 %v301
  %353 = vmatmul.bf16.gmra.mxu0 %v310
  %v354 = vpop.f32.mrf.mxu0
  %v355 = vadd.f32 %v161, %v354
  %v356 = vpop.f32.mrf.mxu0
  %v357 = vadd.f32 %v163, %v356
  %358 = vmatmul.bf16.gmra.mxu0 %v313
  %v359 = vpop.f32.mrf.mxu0
  %v360 = vadd.f32 %v166, %v359
  %v361 = vpop.f32.mrf.mxu0
  %v362 = vadd.f32 %v168, %v361
  %363 = vmatmul.bf16.gmra.mxu0 %v316
  %v364 = vpop.f32.mrf.mxu0
  %v365 = vadd.f32 %v171, %v364
  %v366 = vpop.f32.mrf.mxu0
  %v367 = vadd.f32 %v173, %v366
  %368 = vmatmul.bf16.gmra.mxu0 %v319
  %v369 = vpop.f32.mrf.mxu0
  %v370 = vadd.f32 %v176, %v369
  %v371 = vpop.f32.mrf.mxu0
  %v372 = vadd.f32 %v178, %v371
  %373 = vmatmul.bf16.gmra.mxu0 %v322
  %v374 = vpop.f32.mrf.mxu0
  %v375 = vadd.f32 %v181, %v374
  %v376 = vpop.f32.mrf.mxu0
  %v377 = vadd.f32 %v183, %v376
  %378 = vmatmul.bf16.gmra.mxu0 %v325
  %v379 = vpop.f32.mrf.mxu0
  %v380 = vadd.f32 %v186, %v379
  %v381 = vpop.f32.mrf.mxu0
  %v382 = vadd.f32 %v188, %v381
  %383 = vmatmul.bf16.gmra.mxu0 %v328
  %v384 = vpop.f32.mrf.mxu0
  %v385 = vadd.f32 %v191, %v384
  %v386 = vpop.f32.mrf.mxu0
  %v387 = vadd.f32 %v193, %v386
  %388 = vmatmul.bf16.gmra.mxu0 %v331
  %v389 = vpop.f32.mrf.mxu0
  %v390 = vadd.f32 %v196, %v389
  %v391 = vpop.f32.mrf.mxu0
  %v392 = vadd.f32 %v198, %v391
  %393 = vmatmul.bf16.gmra.mxu0 %v334
  %v394 = vpop.f32.mrf.mxu0
  %v395 = vadd.f32 %v201, %v394
  %v396 = vpop.f32.mrf.mxu0
  %v397 = vadd.f32 %v203, %v396
  %398 = vmatmul.bf16.gmra.mxu0 %v337
  %v399 = vpop.f32.mrf.mxu0
  %v400 = vadd.f32 %v206, %v399
  %v401 = vpop.f32.mrf.mxu0
  %v402 = vadd.f32 %v208, %v401
  %403 = vmatmul.bf16.gmra.mxu0 %v340
  %v404 = vpop.f32.mrf.mxu0
  %v405 = vadd.f32 %v211, %v404
  %v406 = vpop.f32.mrf.mxu0
  %v407 = vadd.f32 %v213, %v406
  %408 = vmatmul.bf16.gmra.mxu0 %v343
  %v409 = vpop.f32.mrf.mxu0
  %v410 = vadd.f32 %v216, %v409
  %v411 = vpop.f32.mrf.mxu0
  %v412 = vadd.f32 %v218, %v411
  %413 = vdwg.mxu0
  %414 = vmatpush.bf16.msra.mxu0 0
  %415 = vmatpush.bf16.msra.mxu0 0
  %416 = vmatpush.bf16.msra.mxu0 0
  %417 = vmatpush.bf16.msra.mxu0 0
  %418 = vmatpush.bf16.msra.mxu0 0
  %419 = vmatpush.bf16.msra.mxu0 0
  %420 = vmatpush.bf16.msra.mxu0 %v304
  %421 = vmatpush.bf16.msra.mxu0 %v302
  %422 = vmatmul.bf16.gmra.mxu0 %v310
  %v423 = vpop.f32.mrf.mxu0
  %v424 = vadd.f32 %v230, %v423
  %v425 = vpop.f32.mrf.mxu0
  %v426 = vadd.f32 %v232, %v425
  %427 = vmatmul.bf16.gmra.mxu0 %v313
  %v428 = vpop.f32.mrf.mxu0
  %v429 = vadd.f32 %v235, %v428
  %v430 = vpop.f32.mrf.mxu0
  %v431 = vadd.f32 %v237, %v430
  %432 = vmatmul.bf16.gmra.mxu0 %v316
  %v433 = vpop.f32.mrf.mxu0
  %v434 = vadd.f32 %v240, %v433
  %v435 = vpop.f32.mrf.mxu0
  %v436 = vadd.f32 %v242, %v435
  %437 = vmatmul.bf16.gmra.mxu0 %v319
  %v438 = vpop.f32.mrf.mxu0
  %v439 = vadd.f32 %v245, %v438
  %v440 = vpop.f32.mrf.mxu0
  %v441 = vadd.f32 %v247, %v440
  %442 = vmatmul.bf16.gmra.mxu0 %v322
  %v443 = vpop.f32.mrf.mxu0
  %v444 = vadd.f32 %v250, %v443
  %v445 = vpop.f32.mrf.mxu0
  %v446 = vadd.f32 %v252, %v445
  %447 = vmatmul.bf16.gmra.mxu0 %v325
  %v448 = vpop.f32.mrf.mxu0
  %v449 = vadd.f32 %v255, %v448
  %v450 = vpop.f32.mrf.mxu0
  %v451 = vadd.f32 %v257, %v450
  %452 = vmatmul.bf16.gmra.mxu0 %v328
  %v453 = vpop.f32.mrf.mxu0
  %v454 = vadd.f32 %v260, %v453
  %v455 = vpop.f32.mrf.mxu0
  %v456 = vadd.f32 %v262, %v455
  %457 = vmatmul.bf16.gmra.mxu0 %v331
  %v458 = vpop.f32.mrf.mxu0
  %v459 = vadd.f32 %v265, %v458
  %v460 = vpop.f32.mrf.mxu0
  %v461 = vadd.f32 %v267, %v460
  %462 = vmatmul.bf16.gmra.mxu0 %v334
  %v463 = vpop.f32.mrf.mxu0
  %v464 = vadd.f32 %v270, %v463
  %v465 = vpop.f32.mrf.mxu0
  %v466 = vadd.f32 %v272, %v465
  %467 = vmatmul.bf16.gmra.mxu0 %v337
  %v468 = vpop.f32.mrf.mxu0
  %v469 = vadd.f32 %v275, %v468
  %v470 = vpop.f32.mrf.mxu0
  %v471 = vadd.f32 %v277, %v470
  %472 = vmatmul.bf16.gmra.mxu0 %v340
  %v473 = vpop.f32.mrf.mxu0
  %v474 = vadd.f32 %v280, %v473
  %v475 = vpop.f32.mrf.mxu0
  %v476 = vadd.f32 %v282, %v475
  %477 = vmatmul.bf16.gmra.mxu0 %v343
  %v478 = vpop.f32.mrf.mxu0
  %v479 = vadd.f32 %v285, %v478
  %v480 = vpop.f32.mrf.mxu0
  %v481 = vadd.f32 %v287, %v480
  %482 = vdwg.mxu0
  %v483 = vpack.c.bf16 %v58, %v57
  %s484 = scalar_lea.vmem %s1, 64
  %v485 = vld [vmem:[%s484] sm:$0xff]
  %v486 = vld [vmem:[%s484 + $0x8] sm:$0xff]
  %v487 = vld [vmem:[%s484 + $0x10] sm:$0xff]
  %v488 = vld [vmem:[%s484 + $0x18] sm:$0xff]
  %v493 = vunpack.c.l.b16 %v485
  %v494 = vunpack.c.h.b16 %v485
  %v495 = vunpack.c.l.b16 %v486
  %v496 = vunpack.c.h.b16 %v486
  %v497 = vunpack.c.l.b16 %v487
  %v498 = vunpack.c.h.b16 %v487
  %v499 = vunpack.c.l.b16 %v488
  %v500 = vunpack.c.h.b16 %v488
  %v501 = vpack.c.b16 %v495, %v493
  %v502 = vpack.c.b16 %v496, %v494
  %v503 = vpack.c.b16 %v499, %v497
  %v504 = vpack.c.b16 %v500, %v498
  %v510 = vsel %vm114, %v483, 0
  %512 = vmatpush.bf16.msra.mxu0 0
  %513 = vmatpush.bf16.msra.mxu0 0
  %514 = vmatpush.bf16.msra.mxu0 0
  %515 = vmatpush.bf16.msra.mxu0 0
  %516 = vmatpush.bf16.msra.mxu0 0
  %517 = vmatpush.bf16.msra.mxu0 0
  %518 = vmatpush.bf16.msra.mxu0 %v503
  %519 = vmatpush.bf16.msra.mxu0 %v501
  %520 = vmatmul.bf16.gmra.mxu0 %v313
  %v521 = vpop.f32.mrf.mxu0
  %v522 = vadd.f32 0.0, %v521
  %v523 = vpop.f32.mrf.mxu0
  %v524 = vadd.f32 0.0, %v523
  %525 = vmatmul.bf16.gmra.mxu0 %v316
  %v526 = vpop.f32.mrf.mxu0
  %v527 = vadd.f32 0.0, %v526
  %v528 = vpop.f32.mrf.mxu0
  %v529 = vadd.f32 0.0, %v528
  %530 = vmatmul.bf16.gmra.mxu0 %v319
  %v531 = vpop.f32.mrf.mxu0
  %v532 = vadd.f32 0.0, %v531
  %v533 = vpop.f32.mrf.mxu0
  %v534 = vadd.f32 0.0, %v533
  %535 = vmatmul.bf16.gmra.mxu0 %v322
  %v536 = vpop.f32.mrf.mxu0
  %v537 = vadd.f32 0.0, %v536
  %v538 = vpop.f32.mrf.mxu0
  %v539 = vadd.f32 0.0, %v538
  %540 = vmatmul.bf16.gmra.mxu0 %v325
  %v541 = vpop.f32.mrf.mxu0
  %v542 = vadd.f32 0.0, %v541
  %v543 = vpop.f32.mrf.mxu0
  %v544 = vadd.f32 0.0, %v543
  %545 = vmatmul.bf16.gmra.mxu0 %v328
  %v546 = vpop.f32.mrf.mxu0
  %v547 = vadd.f32 0.0, %v546
  %v548 = vpop.f32.mrf.mxu0
  %v549 = vadd.f32 0.0, %v548
  %550 = vmatmul.bf16.gmra.mxu0 %v331
  %v551 = vpop.f32.mrf.mxu0
  %v552 = vadd.f32 0.0, %v551
  %v553 = vpop.f32.mrf.mxu0
  %v554 = vadd.f32 0.0, %v553
  %555 = vmatmul.bf16.gmra.mxu0 %v334
  %v556 = vpop.f32.mrf.mxu0
  %v557 = vadd.f32 0.0, %v556
  %v558 = vpop.f32.mrf.mxu0
  %v559 = vadd.f32 0.0, %v558
  %560 = vmatmul.bf16.gmra.mxu0 %v337
  %v561 = vpop.f32.mrf.mxu0
  %v562 = vadd.f32 0.0, %v561
  %v563 = vpop.f32.mrf.mxu0
  %v564 = vadd.f32 0.0, %v563
  %565 = vmatmul.bf16.gmra.mxu0 %v340
  %v566 = vpop.f32.mrf.mxu0
  %v567 = vadd.f32 0.0, %v566
  %v568 = vpop.f32.mrf.mxu0
  %v569 = vadd.f32 0.0, %v568
  %570 = vmatmul.bf16.gmra.mxu0 %v343
  %v571 = vpop.f32.mrf.mxu0
  %v572 = vadd.f32 0.0, %v571
  %v573 = vpop.f32.mrf.mxu0
  %v574 = vadd.f32 0.0, %v573
  %575 = vmatmul.bf16.gmra.mxu0 %v510
  %v576 = vpop.f32.mrf.mxu0
  %v577 = vadd.f32 0.0, %v576
  %v578 = vpop.f32.mrf.mxu0
  %v579 = vadd.f32 0.0, %v578
  %580 = vdwg.mxu0
  %581 = vmatpush.bf16.msra.mxu0 0
  %582 = vmatpush.bf16.msra.mxu0 0
  %583 = vmatpush.bf16.msra.mxu0 0
  %584 = vmatpush.bf16.msra.mxu0 0
  %585 = vmatpush.bf16.msra.mxu0 0
  %586 = vmatpush.bf16.msra.mxu0 0
  %587 = vmatpush.bf16.msra.mxu0 %v504
  %588 = vmatpush.bf16.msra.mxu0 %v502
  %589 = vmatmul.bf16.gmra.mxu0 %v313
  %v590 = vpop.f32.mrf.mxu0
  %v591 = vadd.f32 0.0, %v590
  %v592 = vpop.f32.mrf.mxu0
  %v593 = vadd.f32 0.0, %v592
  %594 = vmatmul.bf16.gmra.mxu0 %v316
  %v595 = vpop.f32.mrf.mxu0
  %v596 = vadd.f32 0.0, %v595
  %v597 = vpop.f32.mrf.mxu0
  %v598 = vadd.f32 0.0, %v597
  %599 = vmatmul.bf16.gmra.mxu0 %v319
  %v600 = vpop.f32.mrf.mxu0
  %v601 = vadd.f32 0.0, %v600
  %v602 = vpop.f32.mrf.mxu0
  %v603 = vadd.f32 0.0, %v602
  %604 = vmatmul.bf16.gmra.mxu0 %v322
  %v605 = vpop.f32.mrf.mxu0
  %v606 = vadd.f32 0.0, %v605
  %v607 = vpop.f32.mrf.mxu0
  %v608 = vadd.f32 0.0, %v607
  %609 = vmatmul.bf16.gmra.mxu0 %v325
  %v610 = vpop.f32.mrf.mxu0
  %v611 = vadd.f32 0.0, %v610
  %v612 = vpop.f32.mrf.mxu0
  %v613 = vadd.f32 0.0, %v612
  %614 = vmatmul.bf16.gmra.mxu0 %v328
  %v615 = vpop.f32.mrf.mxu0
  %v616 = vadd.f32 0.0, %v615
  %v617 = vpop.f32.mrf.mxu0
  %v618 = vadd.f32 0.0, %v617
  %619 = vmatmul.bf16.gmra.mxu0 %v331
  %v620 = vpop.f32.mrf.mxu0
  %v621 = vadd.f32 0.0, %v620
  %v622 = vpop.f32.mrf.mxu0
  %v623 = vadd.f32 0.0, %v622
  %624 = vmatmul.bf16.gmra.mxu0 %v334
  %v625 = vpop.f32.mrf.mxu0
  %v626 = vadd.f32 0.0, %v625
  %v627 = vpop.f32.mrf.mxu0
  %v628 = vadd.f32 0.0, %v627
  %629 = vmatmul.bf16.gmra.mxu0 %v337
  %v630 = vpop.f32.mrf.mxu0
  %v631 = vadd.f32 0.0, %v630
  %v632 = vpop.f32.mrf.mxu0
  %v633 = vadd.f32 0.0, %v632
  %634 = vmatmul.bf16.gmra.mxu0 %v340
  %v635 = vpop.f32.mrf.mxu0
  %v636 = vadd.f32 0.0, %v635
  %v637 = vpop.f32.mrf.mxu0
  %v638 = vadd.f32 0.0, %v637
  %639 = vmatmul.bf16.gmra.mxu0 %v343
  %v640 = vpop.f32.mrf.mxu0
  %v641 = vadd.f32 0.0, %v640
  %v642 = vpop.f32.mrf.mxu0
  %v643 = vadd.f32 0.0, %v642
  %644 = vmatmul.bf16.gmra.mxu0 %v510
  %v645 = vpop.f32.mrf.mxu0
  %v646 = vadd.f32 0.0, %v645
  %v647 = vpop.f32.mrf.mxu0
  %v648 = vadd.f32 0.0, %v647
  %649 = vdwg.mxu0
  %v650 = vadd.f32 %v355, %v522
  %v651 = vadd.f32 %v424, %v591
  %v652 = vadd.f32 %v357, %v524
  %v653 = vadd.f32 %v426, %v593
  %v654 = vadd.f32 %v360, %v527
  %v655 = vadd.f32 %v429, %v596
  %v656 = vadd.f32 %v362, %v529
  %v657 = vadd.f32 %v431, %v598
  %v658 = vadd.f32 %v365, %v532
  %v659 = vadd.f32 %v434, %v601
  %v660 = vadd.f32 %v367, %v534
  %v661 = vadd.f32 %v436, %v603
  %v662 = vadd.f32 %v370, %v537
  %v663 = vadd.f32 %v439, %v606
  %v664 = vadd.f32 %v372, %v539
  %v665 = vadd.f32 %v441, %v608
  %v666 = vadd.f32 %v375, %v542
  %v667 = vadd.f32 %v444, %v611
  %v668 = vadd.f32 %v377, %v544
  %v669 = vadd.f32 %v446, %v613
  %v670 = vadd.f32 %v380, %v547
  %v671 = vadd.f32 %v449, %v616
  %v672 = vadd.f32 %v382, %v549
  %v673 = vadd.f32 %v451, %v618
  %v674 = vadd.f32 %v385, %v552
  %v675 = vadd.f32 %v454, %v621
  %v676 = vadd.f32 %v387, %v554
  %v677 = vadd.f32 %v456, %v623
  %v678 = vadd.f32 %v390, %v557
  %v679 = vadd.f32 %v459, %v626
  %v680 = vadd.f32 %v392, %v559
  %v681 = vadd.f32 %v461, %v628
  %v682 = vadd.f32 %v395, %v562
  %v683 = vadd.f32 %v464, %v631
  %v684 = vadd.f32 %v397, %v564
  %v685 = vadd.f32 %v466, %v633
  %v686 = vadd.f32 %v400, %v567
  %v687 = vadd.f32 %v469, %v636
  %v688 = vadd.f32 %v402, %v569
  %v689 = vadd.f32 %v471, %v638
  %v690 = vadd.f32 %v405, %v572
  %v691 = vadd.f32 %v474, %v641
  %v692 = vadd.f32 %v407, %v574
  %v693 = vadd.f32 %v476, %v643
  %v694 = vadd.f32 %v410, %v577
  %v695 = vadd.f32 %v479, %v646
  %v696 = vadd.f32 %v412, %v579
  %v697 = vadd.f32 %v481, %v648
  %v698 = vpack.c.bf16 %v59, %v58
  %s699 = scalar_lea.vmem %s1, 96
  %v700 = vld [vmem:[%s699] sm:$0xff]
  %v701 = vld [vmem:[%s699 + $0x8] sm:$0xff]
  %v702 = vld [vmem:[%s699 + $0x10] sm:$0xff]
  %v703 = vld [vmem:[%s699 + $0x18] sm:$0xff]
  %v708 = vunpack.c.l.b16 %v700
  %v709 = vunpack.c.h.b16 %v700
  %v710 = vunpack.c.l.b16 %v701
  %v711 = vunpack.c.h.b16 %v701
  %v712 = vunpack.c.l.b16 %v702
  %v713 = vunpack.c.h.b16 %v702
  %v714 = vunpack.c.l.b16 %v703
  %v715 = vunpack.c.h.b16 %v703
  %v716 = vpack.c.b16 %v710, %v708
  %v717 = vpack.c.b16 %v711, %v709
  %v718 = vpack.c.b16 %v714, %v712
  %v719 = vpack.c.b16 %v715, %v713
  %v725 = vsel %vm114, %v698, 0
  %727 = vmatpush.bf16.msra.mxu0 0
  %728 = vmatpush.bf16.msra.mxu0 0
  %729 = vmatpush.bf16.msra.mxu0 0
  %730 = vmatpush.bf16.msra.mxu0 0
  %731 = vmatpush.bf16.msra.mxu0 0
  %732 = vmatpush.bf16.msra.mxu0 0
  %733 = vmatpush.bf16.msra.mxu0 %v718
  %734 = vmatpush.bf16.msra.mxu0 %v716
  %735 = vmatmul.bf16.gmra.mxu0 %v119
  %v736 = vpop.f32.mrf.mxu0
  %v737 = vadd.f32 0.0, %v736
  %v738 = vpop.f32.mrf.mxu0
  %v739 = vadd.f32 0.0, %v738
  %740 = vmatmul.bf16.gmra.mxu0 %v122
  %v741 = vpop.f32.mrf.mxu0
  %v742 = vadd.f32 0.0, %v741
  %v743 = vpop.f32.mrf.mxu0
  %v744 = vadd.f32 0.0, %v743
  %745 = vmatmul.bf16.gmra.mxu0 %v125
  %v746 = vpop.f32.mrf.mxu0
  %v747 = vadd.f32 0.0, %v746
  %v748 = vpop.f32.mrf.mxu0
  %v749 = vadd.f32 0.0, %v748
  %750 = vmatmul.bf16.gmra.mxu0 %v128
  %v751 = vpop.f32.mrf.mxu0
  %v752 = vadd.f32 0.0, %v751
  %v753 = vpop.f32.mrf.mxu0
  %v754 = vadd.f32 0.0, %v753
  %755 = vmatmul.bf16.gmra.mxu0 %v131
  %v756 = vpop.f32.mrf.mxu0
  %v757 = vadd.f32 0.0, %v756
  %v758 = vpop.f32.mrf.mxu0
  %v759 = vadd.f32 0.0, %v758
  %760 = vmatmul.bf16.gmra.mxu0 %v134
  %v761 = vpop.f32.mrf.mxu0
  %v762 = vadd.f32 0.0, %v761
  %v763 = vpop.f32.mrf.mxu0
  %v764 = vadd.f32 0.0, %v763
  %765 = vmatmul.bf16.gmra.mxu0 %v137
  %v766 = vpop.f32.mrf.mxu0
  %v767 = vadd.f32 0.0, %v766
  %v768 = vpop.f32.mrf.mxu0
  %v769 = vadd.f32 0.0, %v768
  %770 = vmatmul.bf16.gmra.mxu0 %v140
  %v771 = vpop.f32.mrf.mxu0
  %v772 = vadd.f32 0.0, %v771
  %v773 = vpop.f32.mrf.mxu0
  %v774 = vadd.f32 0.0, %v773
  %775 = vmatmul.bf16.gmra.mxu0 %v143
  %v776 = vpop.f32.mrf.mxu0
  %v777 = vadd.f32 0.0, %v776
  %v778 = vpop.f32.mrf.mxu0
  %v779 = vadd.f32 0.0, %v778
  %780 = vmatmul.bf16.gmra.mxu0 %v146
  %v781 = vpop.f32.mrf.mxu0
  %v782 = vadd.f32 0.0, %v781
  %v783 = vpop.f32.mrf.mxu0
  %v784 = vadd.f32 0.0, %v783
  %785 = vmatmul.bf16.gmra.mxu0 %v149
  %v786 = vpop.f32.mrf.mxu0
  %v787 = vadd.f32 0.0, %v786
  %v788 = vpop.f32.mrf.mxu0
  %v789 = vadd.f32 0.0, %v788
  %790 = vmatmul.bf16.gmra.mxu0 %v725
  %v791 = vpop.f32.mrf.mxu0
  %v792 = vadd.f32 0.0, %v791
  %v793 = vpop.f32.mrf.mxu0
  %v794 = vadd.f32 0.0, %v793
  %795 = vdwg.mxu0
  %796 = vmatpush.bf16.msra.mxu0 0
  %797 = vmatpush.bf16.msra.mxu0 0
  %798 = vmatpush.bf16.msra.mxu0 0
  %799 = vmatpush.bf16.msra.mxu0 0
  %800 = vmatpush.bf16.msra.mxu0 0
  %801 = vmatpush.bf16.msra.mxu0 0
  %802 = vmatpush.bf16.msra.mxu0 %v719
  %803 = vmatpush.bf16.msra.mxu0 %v717
  %804 = vmatmul.bf16.gmra.mxu0 %v119
  %v805 = vpop.f32.mrf.mxu0
  %v806 = vadd.f32 0.0, %v805
  %v807 = vpop.f32.mrf.mxu0
  %v808 = vadd.f32 0.0, %v807
  %809 = vmatmul.bf16.gmra.mxu0 %v122
  %v810 = vpop.f32.mrf.mxu0
  %v811 = vadd.f32 0.0, %v810
  %v812 = vpop.f32.mrf.mxu0
  %v813 = vadd.f32 0.0, %v812
  %814 = vmatmul.bf16.gmra.mxu0 %v125
  %v815 = vpop.f32.mrf.mxu0
  %v816 = vadd.f32 0.0, %v815
  %v817 = vpop.f32.mrf.mxu0
  %v818 = vadd.f32 0.0, %v817
  %819 = vmatmul.bf16.gmra.mxu0 %v128
  %v820 = vpop.f32.mrf.mxu0
  %v821 = vadd.f32 0.0, %v820
  %v822 = vpop.f32.mrf.mxu0
  %v823 = vadd.f32 0.0, %v822
  %824 = vmatmul.bf16.gmra.mxu0 %v131
  %v825 = vpop.f32.mrf.mxu0
  %v826 = vadd.f32 0.0, %v825
  %v827 = vpop.f32.mrf.mxu0
  %v828 = vadd.f32 0.0, %v827
  %829 = vmatmul.bf16.gmra.mxu0 %v134
  %v830 = vpop.f32.mrf.mxu0
  %v831 = vadd.f32 0.0, %v830
  %v832 = vpop.f32.mrf.mxu0
  %v833 = vadd.f32 0.0, %v832
  %834 = vmatmul.bf16.gmra.mxu0 %v137
  %v835 = vpop.f32.mrf.mxu0
  %v836 = vadd.f32 0.0, %v835
  %v837 = vpop.f32.mrf.mxu0
  %v838 = vadd.f32 0.0, %v837
  %839 = vmatmul.bf16.gmra.mxu0 %v140
  %v840 = vpop.f32.mrf.mxu0
  %v841 = vadd.f32 0.0, %v840
  %v842 = vpop.f32.mrf.mxu0
  %v843 = vadd.f32 0.0, %v842
  %844 = vmatmul.bf16.gmra.mxu0 %v143
  %v845 = vpop.f32.mrf.mxu0
  %v846 = vadd.f32 0.0, %v845
  %v847 = vpop.f32.mrf.mxu0
  %v848 = vadd.f32 0.0, %v847
  %849 = vmatmul.bf16.gmra.mxu0 %v146
  %v850 = vpop.f32.mrf.mxu0
  %v851 = vadd.f32 0.0, %v850
  %v852 = vpop.f32.mrf.mxu0
  %v853 = vadd.f32 0.0, %v852
  %854 = vmatmul.bf16.gmra.mxu0 %v149
  %v855 = vpop.f32.mrf.mxu0
  %v856 = vadd.f32 0.0, %v855
  %v857 = vpop.f32.mrf.mxu0
  %v858 = vadd.f32 0.0, %v857
  %859 = vmatmul.bf16.gmra.mxu0 %v725
  %v860 = vpop.f32.mrf.mxu0
  %v861 = vadd.f32 0.0, %v860
  %v862 = vpop.f32.mrf.mxu0
  %v863 = vadd.f32 0.0, %v862
  %864 = vdwg.mxu0
  %v865 = vadd.f32 %v650, %v737
  %v866 = vadd.f32 %v651, %v806
  %v867 = vadd.f32 %v652, %v739
  %v868 = vadd.f32 %v653, %v808
  %v869 = vadd.f32 %v654, %v742
  %v870 = vadd.f32 %v655, %v811
  %v871 = vadd.f32 %v656, %v744
  %v872 = vadd.f32 %v657, %v813
  %v873 = vadd.f32 %v658, %v747
  %v874 = vadd.f32 %v659, %v816
  %v875 = vadd.f32 %v660, %v749
  %v876 = vadd.f32 %v661, %v818
  %v877 = vadd.f32 %v662, %v752
  %v878 = vadd.f32 %v663, %v821
  %v879 = vadd.f32 %v664, %v754
  %v880 = vadd.f32 %v665, %v823
  %v881 = vadd.f32 %v666, %v757
  %v882 = vadd.f32 %v667, %v826
  %v883 = vadd.f32 %v668, %v759
  %v884 = vadd.f32 %v669, %v828
  %v885 = vadd.f32 %v670, %v762
  %v886 = vadd.f32 %v671, %v831
  %v887 = vadd.f32 %v672, %v764
  %v888 = vadd.f32 %v673, %v833
  %v889 = vadd.f32 %v674, %v767
  %v890 = vadd.f32 %v675, %v836
  %v891 = vadd.f32 %v676, %v769
  %v892 = vadd.f32 %v677, %v838
  %v893 = vadd.f32 %v678, %v772
  %v894 = vadd.f32 %v679, %v841
  %v895 = vadd.f32 %v680, %v774
  %v896 = vadd.f32 %v681, %v843
  %v897 = vadd.f32 %v682, %v777
  %v898 = vadd.f32 %v683, %v846
  %v899 = vadd.f32 %v684, %v779
  %v900 = vadd.f32 %v685, %v848
  %v901 = vadd.f32 %v686, %v782
  %v902 = vadd.f32 %v687, %v851
  %v903 = vadd.f32 %v688, %v784
  %v904 = vadd.f32 %v689, %v853
  %v905 = vadd.f32 %v690, %v787
  %v906 = vadd.f32 %v691, %v856
  %v907 = vadd.f32 %v692, %v789
  %v908 = vadd.f32 %v693, %v858
  %v909 = vadd.f32 %v694, %v792
  %v910 = vadd.f32 %v695, %v861
  %v911 = vadd.f32 %v696, %v794
  %v912 = vadd.f32 %v697, %v863
  %v913 = vpack.c.bf16 %v60, %v59
  %s914 = scalar_lea.vmem %s1, 128
  %v915 = vld [vmem:[%s914] sm:$0xff]
  %v916 = vld [vmem:[%s914 + $0x8] sm:$0xff]
  %v917 = vld [vmem:[%s914 + $0x10] sm:$0xff]
  %v918 = vld [vmem:[%s914 + $0x18] sm:$0xff]
  %v923 = vunpack.c.l.b16 %v915
  %v924 = vunpack.c.h.b16 %v915
  %v925 = vunpack.c.l.b16 %v916
  %v926 = vunpack.c.h.b16 %v916
  %v927 = vunpack.c.l.b16 %v917
  %v928 = vunpack.c.h.b16 %v917
  %v929 = vunpack.c.l.b16 %v918
  %v930 = vunpack.c.h.b16 %v918
  %v931 = vpack.c.b16 %v925, %v923
  %v932 = vpack.c.b16 %v926, %v924
  %v933 = vpack.c.b16 %v929, %v927
  %v934 = vpack.c.b16 %v930, %v928
  %v940 = vsel %vm114, %v913, 0
  %942 = vmatpush.bf16.msra.mxu0 0
  %943 = vmatpush.bf16.msra.mxu0 0
  %944 = vmatpush.bf16.msra.mxu0 0
  %945 = vmatpush.bf16.msra.mxu0 0
  %946 = vmatpush.bf16.msra.mxu0 0
  %947 = vmatpush.bf16.msra.mxu0 0
  %948 = vmatpush.bf16.msra.mxu0 %v933
  %949 = vmatpush.bf16.msra.mxu0 %v931
  %950 = vmatmul.bf16.gmra.mxu0 %v316
  %v951 = vpop.f32.mrf.mxu0
  %v952 = vadd.f32 0.0, %v951
  %v953 = vpop.f32.mrf.mxu0
  %v954 = vadd.f32 0.0, %v953
  %955 = vmatmul.bf16.gmra.mxu0 %v319
  %v956 = vpop.f32.mrf.mxu0
  %v957 = vadd.f32 0.0, %v956
  %v958 = vpop.f32.mrf.mxu0
  %v959 = vadd.f32 0.0, %v958
  %960 = vmatmul.bf16.gmra.mxu0 %v322
  %v961 = vpop.f32.mrf.mxu0
  %v962 = vadd.f32 0.0, %v961
  %v963 = vpop.f32.mrf.mxu0
  %v964 = vadd.f32 0.0, %v963
  %965 = vmatmul.bf16.gmra.mxu0 %v325
  %v966 = vpop.f32.mrf.mxu0
  %v967 = vadd.f32 0.0, %v966
  %v968 = vpop.f32.mrf.mxu0
  %v969 = vadd.f32 0.0, %v968
  %970 = vmatmul.bf16.gmra.mxu0 %v328
  %v971 = vpop.f32.mrf.mxu0
  %v972 = vadd.f32 0.0, %v971
  %v973 = vpop.f32.mrf.mxu0
  %v974 = vadd.f32 0.0, %v973
  %975 = vmatmul.bf16.gmra.mxu0 %v331
  %v976 = vpop.f32.mrf.mxu0
  %v977 = vadd.f32 0.0, %v976
  %v978 = vpop.f32.mrf.mxu0
  %v979 = vadd.f32 0.0, %v978
  %980 = vmatmul.bf16.gmra.mxu0 %v334
  %v981 = vpop.f32.mrf.mxu0
  %v982 = vadd.f32 0.0, %v981
  %v983 = vpop.f32.mrf.mxu0
  %v984 = vadd.f32 0.0, %v983
  %985 = vmatmul.bf16.gmra.mxu0 %v337
  %v986 = vpop.f32.mrf.mxu0
  %v987 = vadd.f32 0.0, %v986
  %v988 = vpop.f32.mrf.mxu0
  %v989 = vadd.f32 0.0, %v988
  %990 = vmatmul.bf16.gmra.mxu0 %v340
  %v991 = vpop.f32.mrf.mxu0
  %v992 = vadd.f32 0.0, %v991
  %v993 = vpop.f32.mrf.mxu0
  %v994 = vadd.f32 0.0, %v993
  %995 = vmatmul.bf16.gmra.mxu0 %v343
  %v996 = vpop.f32.mrf.mxu0
  %v997 = vadd.f32 0.0, %v996
  %v998 = vpop.f32.mrf.mxu0
  %v999 = vadd.f32 0.0, %v998
  %1000 = vmatmul.bf16.gmra.mxu0 %v510
  %v1001 = vpop.f32.mrf.mxu0
  %v1002 = vadd.f32 0.0, %v1001
  %v1003 = vpop.f32.mrf.mxu0
  %v1004 = vadd.f32 0.0, %v1003
  %1005 = vmatmul.bf16.gmra.mxu0 %v940
  %v1006 = vpop.f32.mrf.mxu0
  %v1007 = vadd.f32 0.0, %v1006
  %v1008 = vpop.f32.mrf.mxu0
  %v1009 = vadd.f32 0.0, %v1008
  %1010 = vdwg.mxu0
  %1011 = vmatpush.bf16.msra.mxu0 0
  %1012 = vmatpush.bf16.msra.mxu0 0
  %1013 = vmatpush.bf16.msra.mxu0 0
  %1014 = vmatpush.bf16.msra.mxu0 0
  %1015 = vmatpush.bf16.msra.mxu0 0
  %1016 = vmatpush.bf16.msra.mxu0 0
  %1017 = vmatpush.bf16.msra.mxu0 %v934
  %1018 = vmatpush.bf16.msra.mxu0 %v932
  %1019 = vmatmul.bf16.gmra.mxu0 %v316
  %v1020 = vpop.f32.mrf.mxu0
  %v1021 = vadd.f32 0.0, %v1020
  %v1022 = vpop.f32.mrf.mxu0
  %v1023 = vadd.f32 0.0, %v1022
  %1024 = vmatmul.bf16.gmra.mxu0 %v319
  %v1025 = vpop.f32.mrf.mxu0
  %v1026 = vadd.f32 0.0, %v1025
  %v1027 = vpop.f32.mrf.mxu0
  %v1028 = vadd.f32 0.0, %v1027
  %1029 = vmatmul.bf16.gmra.mxu0 %v322
  %v1030 = vpop.f32.mrf.mxu0
  %v1031 = vadd.f32 0.0, %v1030
  %v1032 = vpop.f32.mrf.mxu0
  %v1033 = vadd.f32 0.0, %v1032
  %1034 = vmatmul.bf16.gmra.mxu0 %v325
  %v1035 = vpop.f32.mrf.mxu0
  %v1036 = vadd.f32 0.0, %v1035
  %v1037 = vpop.f32.mrf.mxu0
  %v1038 = vadd.f32 0.0, %v1037
  %1039 = vmatmul.bf16.gmra.mxu0 %v328
  %v1040 = vpop.f32.mrf.mxu0
  %v1041 = vadd.f32 0.0, %v1040
  %v1042 = vpop.f32.mrf.mxu0
  %v1043 = vadd.f32 0.0, %v1042
  %1044 = vmatmul.bf16.gmra.mxu0 %v331
  %v1045 = vpop.f32.mrf.mxu0
  %v1046 = vadd.f32 0.0, %v1045
  %v1047 = vpop.f32.mrf.mxu0
  %v1048 = vadd.f32 0.0, %v1047
  %1049 = vmatmul.bf16.gmra.mxu0 %v334
  %v1050 = vpop.f32.mrf.mxu0
  %v1051 = vadd.f32 0.0, %v1050
  %v1052 = vpop.f32.mrf.mxu0
  %v1053 = vadd.f32 0.0, %v1052
  %1054 = vmatmul.bf16.gmra.mxu0 %v337
  %v1055 = vpop.f32.mrf.mxu0
  %v1056 = vadd.f32 0.0, %v1055
  %v1057 = vpop.f32.mrf.mxu0
  %v1058 = vadd.f32 0.0, %v1057
  %1059 = vmatmul.bf16.gmra.mxu0 %v340
  %v1060 = vpop.f32.mrf.mxu0
  %v1061 = vadd.f32 0.0, %v1060
  %v1062 = vpop.f32.mrf.mxu0
  %v1063 = vadd.f32 0.0, %v1062
  %1064 = vmatmul.bf16.gmra.mxu0 %v343
  %v1065 = vpop.f32.mrf.mxu0
  %v1066 = vadd.f32 0.0, %v1065
  %v1067 = vpop.f32.mrf.mxu0
  %v1068 = vadd.f32 0.0, %v1067
  %1069 = vmatmul.bf16.gmra.mxu0 %v510
  %v1070 = vpop.f32.mrf.mxu0
  %v1071 = vadd.f32 0.0, %v1070
  %v1072 = vpop.f32.mrf.mxu0
  %v1073 = vadd.f32 0.0, %v1072
  %1074 = vmatmul.bf16.gmra.mxu0 %v940
  %v1075 = vpop.f32.mrf.mxu0
  %v1076 = vadd.f32 0.0, %v1075
  %v1077 = vpop.f32.mrf.mxu0
  %v1078 = vadd.f32 0.0, %v1077
  %1079 = vdwg.mxu0
  %v1080 = vadd.f32 %v865, %v952
  %v1081 = vadd.f32 %v866, %v1021
  %v1082 = vadd.f32 %v867, %v954
  %v1083 = vadd.f32 %v868, %v1023
  %v1084 = vadd.f32 %v869, %v957
  %v1085 = vadd.f32 %v870, %v1026
  %v1086 = vadd.f32 %v871, %v959
  %v1087 = vadd.f32 %v872, %v1028
  %v1088 = vadd.f32 %v873, %v962
  %v1089 = vadd.f32 %v874, %v1031
  %v1090 = vadd.f32 %v875, %v964
  %v1091 = vadd.f32 %v876, %v1033
  %v1092 = vadd.f32 %v877, %v967
  %v1093 = vadd.f32 %v878, %v1036
  %v1094 = vadd.f32 %v879, %v969
  %v1095 = vadd.f32 %v880, %v1038
  %v1096 = vadd.f32 %v881, %v972
  %v1097 = vadd.f32 %v882, %v1041
  %v1098 = vadd.f32 %v883, %v974
  %v1099 = vadd.f32 %v884, %v1043
  %v1100 = vadd.f32 %v885, %v977
  %v1101 = vadd.f32 %v886, %v1046
  %v1102 = vadd.f32 %v887, %v979
  %v1103 = vadd.f32 %v888, %v1048
  %v1104 = vadd.f32 %v889, %v982
  %v1105 = vadd.f32 %v890, %v1051
  %v1106 = vadd.f32 %v891, %v984
  %v1107 = vadd.f32 %v892, %v1053
  %v1108 = vadd.f32 %v893, %v987
  %v1109 = vadd.f32 %v894, %v1056
  %v1110 = vadd.f32 %v895, %v989
  %v1111 = vadd.f32 %v896, %v1058
  %v1112 = vadd.f32 %v897, %v992
  %v1113 = vadd.f32 %v898, %v1061
  %v1114 = vadd.f32 %v899, %v994
  %v1115 = vadd.f32 %v900, %v1063
  %v1116 = vadd.f32 %v901, %v997
  %v1117 = vadd.f32 %v902, %v1066
  %v1118 = vadd.f32 %v903, %v999
  %v1119 = vadd.f32 %v904, %v1068
  %v1120 = vadd.f32 %v905, %v1002
  %v1121 = vadd.f32 %v906, %v1071
  %v1122 = vadd.f32 %v907, %v1004
  %v1123 = vadd.f32 %v908, %v1073
  %v1124 = vadd.f32 %v909, %v1007
  %v1125 = vadd.f32 %v910, %v1076
  %v1126 = vadd.f32 %v911, %v1009
  %v1127 = vadd.f32 %v912, %v1078
  %v1128 = vld [vmem:[%s2] sm:$0x3]
  %v1130 = vperm.slane %v1128, 0
  %v1131 = vperm.slane %v1128, 1
  %v1134 = vadd.f32 %v1080, %v1130
  %v1135 = vadd.f32 %v1081, %v1131
  %v1136 = vadd.f32 %v1082, %v1130
  %v1137 = vadd.f32 %v1083, %v1131
  %v1138 = vadd.f32 %v1084, %v1130
  %v1139 = vadd.f32 %v1085, %v1131
  %v1140 = vadd.f32 %v1086, %v1130
  %v1141 = vadd.f32 %v1087, %v1131
  %v1142 = vadd.f32 %v1088, %v1130
  %v1143 = vadd.f32 %v1089, %v1131
  %v1144 = vadd.f32 %v1090, %v1130
  %v1145 = vadd.f32 %v1091, %v1131
  %v1146 = vadd.f32 %v1092, %v1130
  %v1147 = vadd.f32 %v1093, %v1131
  %v1148 = vadd.f32 %v1094, %v1130
  %v1149 = vadd.f32 %v1095, %v1131
  %v1150 = vadd.f32 %v1096, %v1130
  %v1151 = vadd.f32 %v1097, %v1131
  %v1152 = vadd.f32 %v1098, %v1130
  %v1153 = vadd.f32 %v1099, %v1131
  %v1154 = vadd.f32 %v1100, %v1130
  %v1155 = vadd.f32 %v1101, %v1131
  %v1156 = vadd.f32 %v1102, %v1130
  %v1157 = vadd.f32 %v1103, %v1131
  %v1158 = vadd.f32 %v1104, %v1130
  %v1159 = vadd.f32 %v1105, %v1131
  %v1160 = vadd.f32 %v1106, %v1130
  %v1161 = vadd.f32 %v1107, %v1131
  %v1162 = vadd.f32 %v1108, %v1130
  %v1163 = vadd.f32 %v1109, %v1131
  %v1164 = vadd.f32 %v1110, %v1130
  %v1165 = vadd.f32 %v1111, %v1131
  %v1166 = vadd.f32 %v1112, %v1130
  %v1167 = vadd.f32 %v1113, %v1131
  %v1168 = vadd.f32 %v1114, %v1130
  %v1169 = vadd.f32 %v1115, %v1131
  %v1170 = vadd.f32 %v1116, %v1130
  %v1171 = vadd.f32 %v1117, %v1131
  %v1172 = vadd.f32 %v1118, %v1130
  %v1173 = vadd.f32 %v1119, %v1131
  %v1174 = vadd.f32 %v1120, %v1130
  %v1175 = vadd.f32 %v1121, %v1131
  %v1176 = vadd.f32 %v1122, %v1130
  %v1177 = vadd.f32 %v1123, %v1131
  %v1178 = vadd.f32 %v1124, %v1130
  %v1179 = vadd.f32 %v1125, %v1131
  %v1180 = vadd.f32 %v1126, %v1130
  %v1181 = vadd.f32 %v1127, %v1131
  %v1182 = vmax.f32 %v1134, 0.0
  %v1183 = vmax.f32 %v1135, 0.0
  %v1184 = vmax.f32 %v1136, 0.0
  %v1185 = vmax.f32 %v1137, 0.0
  %v1186 = vmax.f32 %v1138, 0.0
  %v1187 = vmax.f32 %v1139, 0.0
  %v1188 = vmax.f32 %v1140, 0.0
  %v1189 = vmax.f32 %v1141, 0.0
  %v1190 = vmax.f32 %v1142, 0.0
  %v1191 = vmax.f32 %v1143, 0.0
  %v1192 = vmax.f32 %v1144, 0.0
  %v1193 = vmax.f32 %v1145, 0.0
  %v1194 = vmax.f32 %v1146, 0.0
  %v1195 = vmax.f32 %v1147, 0.0
  %v1196 = vmax.f32 %v1148, 0.0
  %v1197 = vmax.f32 %v1149, 0.0
  %v1198 = vmax.f32 %v1150, 0.0
  %v1199 = vmax.f32 %v1151, 0.0
  %v1200 = vmax.f32 %v1152, 0.0
  %v1201 = vmax.f32 %v1153, 0.0
  %v1202 = vmax.f32 %v1154, 0.0
  %v1203 = vmax.f32 %v1155, 0.0
  %v1204 = vmax.f32 %v1156, 0.0
  %v1205 = vmax.f32 %v1157, 0.0
  %v1206 = vmax.f32 %v1158, 0.0
  %v1207 = vmax.f32 %v1159, 0.0
  %v1208 = vmax.f32 %v1160, 0.0
  %v1209 = vmax.f32 %v1161, 0.0
  %v1210 = vmax.f32 %v1162, 0.0
  %v1211 = vmax.f32 %v1163, 0.0
  %v1212 = vmax.f32 %v1164, 0.0
  %v1213 = vmax.f32 %v1165, 0.0
  %v1214 = vmax.f32 %v1166, 0.0
  %v1215 = vmax.f32 %v1167, 0.0
  %v1216 = vmax.f32 %v1168, 0.0
  %v1217 = vmax.f32 %v1169, 0.0
  %v1218 = vmax.f32 %v1170, 0.0
  %v1219 = vmax.f32 %v1171, 0.0
  %v1220 = vmax.f32 %v1172, 0.0
  %v1221 = vmax.f32 %v1173, 0.0
  %v1222 = vmax.f32 %v1174, 0.0
  %v1223 = vmax.f32 %v1175, 0.0
  %v1224 = vmax.f32 %v1176, 0.0
  %v1225 = vmax.f32 %v1177, 0.0
  %v1226 = vmax.f32 %v1178, 0.0
  %v1227 = vmax.f32 %v1179, 0.0
  %v1228 = vmax.f32 %v1180, 0.0
  %v1229 = vmax.f32 %v1181, 0.0
  %v1230 = vmax.f32 %v1182, %v1184
  %v1231 = vmax.f32 %v1183, %v1185
  %v1232 = vmax.f32 %v1186, %v1188
  %v1233 = vmax.f32 %v1187, %v1189
  %v1234 = vmax.f32 %v1190, %v1192
  %v1235 = vmax.f32 %v1191, %v1193
  %v1236 = vmax.f32 %v1194, %v1196
  %v1237 = vmax.f32 %v1195, %v1197
  %v1238 = vmax.f32 %v1198, %v1200
  %v1239 = vmax.f32 %v1199, %v1201
  %v1240 = vmax.f32 %v1202, %v1204
  %v1241 = vmax.f32 %v1203, %v1205
  %v1242 = vmax.f32 %v1206, %v1208
  %v1243 = vmax.f32 %v1207, %v1209
  %v1244 = vmax.f32 %v1210, %v1212
  %v1245 = vmax.f32 %v1211, %v1213
  %v1246 = vmax.f32 %v1214, %v1216
  %v1247 = vmax.f32 %v1215, %v1217
  %v1248 = vmax.f32 %v1218, %v1220
  %v1249 = vmax.f32 %v1219, %v1221
  %v1250 = vmax.f32 %v1222, %v1224
  %v1251 = vmax.f32 %v1223, %v1225
  %v1252 = vmax.f32 %v1226, %v1228
  %v1253 = vmax.f32 %v1227, %v1229
  %v1254 = vmax.f32 %v1230, %v1231
  %v1255 = vmax.f32 %v1232, %v1233
  %v1256 = vmax.f32 %v1234, %v1235
  %v1257 = vmax.f32 %v1236, %v1237
  %v1258 = vmax.f32 %v1238, %v1239
  %v1259 = vmax.f32 %v1240, %v1241
  %v1260 = vmax.f32 %v1242, %v1243
  %v1261 = vmax.f32 %v1244, %v1245
  %v1262 = vmax.f32 %v1246, %v1247
  %v1263 = vmax.f32 %v1248, %v1249
  %v1264 = vmax.f32 %v1250, %v1251
  %v1265 = vmax.f32 %v1252, %v1253
  %v1266 = vpack.c.bf16 %v1255, %v1254
  %v1267 = vpack.c.bf16 %v1257, %v1256
  %v1268 = vpack.c.bf16 %v1259, %v1258
  %v1269 = vpack.c.bf16 %v1261, %v1260
  %v1270 = vld [vmem:[%s3] sm:$0xff]
  %v1271 = vld [vmem:[%s3 + $0x8] sm:$0xff]
  %v1272 = vld [vmem:[%s3 + $0x10] sm:$0xff]
  %v1273 = vld [vmem:[%s3 + $0x18] sm:$0xff]
  %v1274 = vld [vmem:[%s3 + $0x20] sm:$0xff]
  %v1275 = vld [vmem:[%s3 + $0x28] sm:$0xff]
  %v1276 = vld [vmem:[%s3 + $0x30] sm:$0xff]
  %v1277 = vld [vmem:[%s3 + $0x38] sm:$0xff]
  %v1278 = vld [vmem:[%s3 + $0x40] sm:$0xff]
  %v1279 = vld [vmem:[%s3 + $0x48] sm:$0xff]
  %v1280 = vld [vmem:[%s3 + $0x50] sm:$0xff]
  %v1281 = vld [vmem:[%s3 + $0x58] sm:$0xff]
  %v1282 = vld [vmem:[%s3 + $0x60] sm:$0xff]
  %v1283 = vld [vmem:[%s3 + $0x68] sm:$0xff]
  %v1284 = vld [vmem:[%s3 + $0x70] sm:$0xff]
  %v1285 = vld [vmem:[%s3 + $0x78] sm:$0xff]
  %v1286 = vpack.c.bf16 %v1256, %v1255
  %v1287 = vpack.c.bf16 %v1258, %v1257
  %v1288 = vpack.c.bf16 %v1260, %v1259
  %v1289 = vpack.c.bf16 %v1262, %v1261
  %s1290 = scalar_lea.vmem %s3, 128
  %v1291 = vld [vmem:[%s1290] sm:$0xff]
  %v1292 = vld [vmem:[%s1290 + $0x8] sm:$0xff]
  %v1293 = vld [vmem:[%s1290 + $0x10] sm:$0xff]
  %v1294 = vld [vmem:[%s1290 + $0x18] sm:$0xff]
  %v1295 = vld [vmem:[%s1290 + $0x20] sm:$0xff]
  %v1296 = vld [vmem:[%s1290 + $0x28] sm:$0xff]
  %v1297 = vld [vmem:[%s1290 + $0x30] sm:$0xff]
  %v1298 = vld [vmem:[%s1290 + $0x38] sm:$0xff]
  %v1299 = vld [vmem:[%s1290 + $0x40] sm:$0xff]
  %v1300 = vld [vmem:[%s1290 + $0x48] sm:$0xff]
  %v1301 = vld [vmem:[%s1290 + $0x50] sm:$0xff]
  %v1302 = vld [vmem:[%s1290 + $0x58] sm:$0xff]
  %v1303 = vld [vmem:[%s1290 + $0x60] sm:$0xff]
  %v1304 = vld [vmem:[%s1290 + $0x68] sm:$0xff]
  %v1305 = vld [vmem:[%s1290 + $0x70] sm:$0xff]
  %v1306 = vld [vmem:[%s1290 + $0x78] sm:$0xff]
  %v1323 = vunpack.c.l.b16 %v1291
  %v1324 = vunpack.c.h.b16 %v1291
  %v1325 = vunpack.c.l.b16 %v1292
  %v1326 = vunpack.c.h.b16 %v1292
  %v1327 = vunpack.c.l.b16 %v1293
  %v1328 = vunpack.c.h.b16 %v1293
  %v1329 = vunpack.c.l.b16 %v1294
  %v1330 = vunpack.c.h.b16 %v1294
  %v1331 = vunpack.c.l.b16 %v1295
  %v1332 = vunpack.c.h.b16 %v1295
  %v1333 = vunpack.c.l.b16 %v1296
  %v1334 = vunpack.c.h.b16 %v1296
  %v1335 = vunpack.c.l.b16 %v1297
  %v1336 = vunpack.c.h.b16 %v1297
  %v1337 = vunpack.c.l.b16 %v1298
  %v1338 = vunpack.c.h.b16 %v1298
  %v1339 = vunpack.c.l.b16 %v1299
  %v1340 = vunpack.c.h.b16 %v1299
  %v1341 = vunpack.c.l.b16 %v1300
  %v1342 = vunpack.c.h.b16 %v1300
  %v1343 = vunpack.c.l.b16 %v1301
  %v1344 = vunpack.c.h.b16 %v1301
  %v1345 = vunpack.c.l.b16 %v1302
  %v1346 = vunpack.c.h.b16 %v1302
  %v1347 = vunpack.c.l.b16 %v1303
  %v1348 = vunpack.c.h.b16 %v1303
  %v1349 = vunpack.c.l.b16 %v1304
  %v1350 = vunpack.c.h.b16 %v1304
  %v1351 = vunpack.c.l.b16 %v1305
  %v1352 = vunpack.c.h.b16 %v1305
  %v1353 = vunpack.c.l.b16 %v1306
  %v1354 = vunpack.c.h.b16 %v1306
  %v1355 = vpack.c.b16 %v1325, %v1323
  %v1356 = vpack.c.b16 %v1326, %v1324
  %v1357 = vpack.c.b16 %v1329, %v1327
  %v1358 = vpack.c.b16 %v1330, %v1328
  %v1359 = vpack.c.b16 %v1333, %v1331
  %v1360 = vpack.c.b16 %v1334, %v1332
  %v1361 = vpack.c.b16 %v1337, %v1335
  %v1362 = vpack.c.b16 %v1338, %v1336
  %v1363 = vpack.c.b16 %v1341, %v1339
  %v1364 = vpack.c.b16 %v1342, %v1340
  %v1365 = vpack.c.b16 %v1345, %v1343
  %v1366 = vpack.c.b16 %v1346, %v1344
  %v1367 = vpack.c.b16 %v1349, %v1347
  %v1368 = vpack.c.b16 %v1350, %v1348
  %v1369 = vpack.c.b16 %v1353, %v1351
  %v1370 = vpack.c.b16 %v1354, %v1352
  %1387 = vmatpush.bf16.msra.mxu0 %v1369
  %1388 = vmatpush.bf16.msra.mxu0 %v1367
  %1389 = vmatpush.bf16.msra.mxu0 %v1365
  %1390 = vmatpush.bf16.msra.mxu0 %v1363
  %1391 = vmatpush.bf16.msra.mxu0 %v1361
  %1392 = vmatpush.bf16.msra.mxu0 %v1359
  %1393 = vmatpush.bf16.msra.mxu0 %v1357
  %1394 = vmatpush.bf16.msra.mxu0 %v1355
  %1395 = vmatmul.bf16.gmra.mxu0 %v1286
  %v1396 = vpop.f32.mrf.mxu0
  %v1397 = vadd.f32 0.0, %v1396
  %v1398 = vpop.f32.mrf.mxu0
  %v1399 = vadd.f32 0.0, %v1398
  %1400 = vmatmul.bf16.gmra.mxu0 %v1287
  %v1401 = vpop.f32.mrf.mxu0
  %v1402 = vadd.f32 0.0, %v1401
  %v1403 = vpop.f32.mrf.mxu0
  %v1404 = vadd.f32 0.0, %v1403
  %1405 = vmatmul.bf16.gmra.mxu0 %v1288
  %v1406 = vpop.f32.mrf.mxu0
  %v1407 = vadd.f32 0.0, %v1406
  %v1408 = vpop.f32.mrf.mxu0
  %v1409 = vadd.f32 0.0, %v1408
  %1410 = vmatmul.bf16.gmra.mxu0 %v1289
  %v1411 = vpop.f32.mrf.mxu0
  %v1412 = vadd.f32 0.0, %v1411
  %v1413 = vpop.f32.mrf.mxu0
  %v1414 = vadd.f32 0.0, %v1413
  %1415 = vdwg.mxu0
  %1416 = vmatpush.bf16.msra.mxu0 %v1370
  %1417 = vmatpush.bf16.msra.mxu0 %v1368
  %1418 = vmatpush.bf16.msra.mxu0 %v1366
  %1419 = vmatpush.bf16.msra.mxu0 %v1364
  %1420 = vmatpush.bf16.msra.mxu0 %v1362
  %1421 = vmatpush.bf16.msra.mxu0 %v1360
  %1422 = vmatpush.bf16.msra.mxu0 %v1358
  %1423 = vmatpush.bf16.msra.mxu0 %v1356
  %1424 = vmatmul.bf16.gmra.mxu0 %v1286
  %v1425 = vpop.f32.mrf.mxu0
  %v1426 = vadd.f32 0.0, %v1425
  %v1427 = vpop.f32.mrf.mxu0
  %v1428 = vadd.f32 0.0, %v1427
  %1429 = vmatmul.bf16.gmra.mxu0 %v1287
  %v1430 = vpop.f32.mrf.mxu0
  %v1431 = vadd.f32 0.0, %v1430
  %v1432 = vpop.f32.mrf.mxu0
  %v1433 = vadd.f32 0.0, %v1432
  %1434 = vmatmul.bf16.gmra.mxu0 %v1288
  %v1435 = vpop.f32.mrf.mxu0
  %v1436 = vadd.f32 0.0, %v1435
  %v1437 = vpop.f32.mrf.mxu0
  %v1438 = vadd.f32 0.0, %v1437
  %1439 = vmatmul.bf16.gmra.mxu0 %v1289
  %v1440 = vpop.f32.mrf.mxu0
  %v1441 = vadd.f32 0.0, %v1440
  %v1442 = vpop.f32.mrf.mxu0
  %v1443 = vadd.f32 0.0, %v1442
  %1444 = vdwg.mxu0
  %v1461 = vunpack.c.l.b16 %v1270
  %v1462 = vunpack.c.h.b16 %v1270
  %v1463 = vunpack.c.l.b16 %v1271
  %v1464 = vunpack.c.h.b16 %v1271
  %v1465 = vunpack.c.l.b16 %v1272
  %v1466 = vunpack.c.h.b16 %v1272
  %v1467 = vunpack.c.l.b16 %v1273
  %v1468 = vunpack.c.h.b16 %v1273
  %v1469 = vunpack.c.l.b16 %v1274
  %v1470 = vunpack.c.h.b16 %v1274
  %v1471 = vunpack.c.l.b16 %v1275
  %v1472 = vunpack.c.h.b16 %v1275
  %v1473 = vunpack.c.l.b16 %v1276
  %v1474 = vunpack.c.h.b16 %v1276
  %v1475 = vunpack.c.l.b16 %v1277
  %v1476 = vunpack.c.h.b16 %v1277
  %v1477 = vunpack.c.l.b16 %v1278
  %v1478 = vunpack.c.h.b16 %v1278
  %v1479 = vunpack.c.l.b16 %v1279
  %v1480 = vunpack.c.h.b16 %v1279
  %v1481 = vunpack.c.l.b16 %v1280
  %v1482 = vunpack.c.h.b16 %v1280
  %v1483 = vunpack.c.l.b16 %v1281
  %v1484 = vunpack.c.h.b16 %v1281
  %v1485 = vunpack.c.l.b16 %v1282
  %v1486 = vunpack.c.h.b16 %v1282
  %v1487 = vunpack.c.l.b16 %v1283
  %v1488 = vunpack.c.h.b16 %v1283
  %v1489 = vunpack.c.l.b16 %v1284
  %v1490 = vunpack.c.h.b16 %v1284
  %v1491 = vunpack.c.l.b16 %v1285
  %v1492 = vunpack.c.h.b16 %v1285
  %v1493 = vpack.c.b16 %v1463, %v1461
  %v1494 = vpack.c.b16 %v1464, %v1462
  %v1495 = vpack.c.b16 %v1467, %v1465
  %v1496 = vpack.c.b16 %v1468, %v1466
  %v1497 = vpack.c.b16 %v1471, %v1469
  %v1498 = vpack.c.b16 %v1472, %v1470
  %v1499 = vpack.c.b16 %v1475, %v1473
  %v1500 = vpack.c.b16 %v1476, %v1474
  %v1501 = vpack.c.b16 %v1479, %v1477
  %v1502 = vpack.c.b16 %v1480, %v1478
  %v1503 = vpack.c.b16 %v1483, %v1481
  %v1504 = vpack.c.b16 %v1484, %v1482
  %v1505 = vpack.c.b16 %v1487, %v1485
  %v1506 = vpack.c.b16 %v1488, %v1486
  %v1507 = vpack.c.b16 %v1491, %v1489
  %v1508 = vpack.c.b16 %v1492, %v1490
  %1525 = vmatpush.bf16.msra.mxu0 %v1507
  %1526 = vmatpush.bf16.msra.mxu0 %v1505
  %1527 = vmatpush.bf16.msra.mxu0 %v1503
  %1528 = vmatpush.bf16.msra.mxu0 %v1501
  %1529 = vmatpush.bf16.msra.mxu0 %v1499
  %1530 = vmatpush.bf16.msra.mxu0 %v1497
  %1531 = vmatpush.bf16.msra.mxu0 %v1495
  %1532 = vmatpush.bf16.msra.mxu0 %v1493
  %1533 = vmatmul.bf16.gmra.mxu0 %v1266
  %v1534 = vpop.f32.mrf.mxu0
  %v1535 = vadd.f32 %v1397, %v1534
  %v1536 = vpop.f32.mrf.mxu0
  %v1537 = vadd.f32 %v1399, %v1536
  %1538 = vmatmul.bf16.gmra.mxu0 %v1267
  %v1539 = vpop.f32.mrf.mxu0
  %v1540 = vadd.f32 %v1402, %v1539
  %v1541 = vpop.f32.mrf.mxu0
  %v1542 = vadd.f32 %v1404, %v1541
  %1543 = vmatmul.bf16.gmra.mxu0 %v1268
  %v1544 = vpop.f32.mrf.mxu0
  %v1545 = vadd.f32 %v1407, %v1544
  %v1546 = vpop.f32.mrf.mxu0
  %v1547 = vadd.f32 %v1409, %v1546
  %1548 = vmatmul.bf16.gmra.mxu0 %v1269
  %v1549 = vpop.f32.mrf.mxu0
  %v1550 = vadd.f32 %v1412, %v1549
  %v1551 = vpop.f32.mrf.mxu0
  %v1552 = vadd.f32 %v1414, %v1551
  %1553 = vdwg.mxu0
  %1554 = vmatpush.bf16.msra.mxu0 %v1508
  %1555 = vmatpush.bf16.msra.mxu0 %v1506
  %1556 = vmatpush.bf16.msra.mxu0 %v1504
  %1557 = vmatpush.bf16.msra.mxu0 %v1502
  %1558 = vmatpush.bf16.msra.mxu0 %v1500
  %1559 = vmatpush.bf16.msra.mxu0 %v1498
  %1560 = vmatpush.bf16.msra.mxu0 %v1496
  %1561 = vmatpush.bf16.msra.mxu0 %v1494
  %1562 = vmatmul.bf16.gmra.mxu0 %v1266
  %v1563 = vpop.f32.mrf.mxu0
  %v1564 = vadd.f32 %v1426, %v1563
  %v1565 = vpop.f32.mrf.mxu0
  %v1566 = vadd.f32 %v1428, %v1565
  %1567 = vmatmul.bf16.gmra.mxu0 %v1267
  %v1568 = vpop.f32.mrf.mxu0
  %v1569 = vadd.f32 %v1431, %v1568
  %v1570 = vpop.f32.mrf.mxu0
  %v1571 = vadd.f32 %v1433, %v1570
  %1572 = vmatmul.bf16.gmra.mxu0 %v1268
  %v1573 = vpop.f32.mrf.mxu0
  %v1574 = vadd.f32 %v1436, %v1573
  %v1575 = vpop.f32.mrf.mxu0
  %v1576 = vadd.f32 %v1438, %v1575
  %1577 = vmatmul.bf16.gmra.mxu0 %v1269
  %v1578 = vpop.f32.mrf.mxu0
  %v1579 = vadd.f32 %v1441, %v1578
  %v1580 = vpop.f32.mrf.mxu0
  %v1581 = vadd.f32 %v1443, %v1580
  %1582 = vdwg.mxu0
  %v1583 = vpack.c.bf16 %v1263, %v1262
  %s1584 = scalar_lea.vmem %s3, 256
  %v1585 = vld [vmem:[%s1584] sm:$0xff]
  %v1586 = vld [vmem:[%s1584 + $0x8] sm:$0xff]
  %v1587 = vld [vmem:[%s1584 + $0x10] sm:$0xff]
  %v1588 = vld [vmem:[%s1584 + $0x18] sm:$0xff]
  %v1589 = vld [vmem:[%s1584 + $0x20] sm:$0xff]
  %v1590 = vld [vmem:[%s1584 + $0x28] sm:$0xff]
  %v1591 = vld [vmem:[%s1584 + $0x30] sm:$0xff]
  %v1592 = vld [vmem:[%s1584 + $0x38] sm:$0xff]
  %v1593 = vld [vmem:[%s1584 + $0x40] sm:$0xff]
  %v1594 = vld [vmem:[%s1584 + $0x48] sm:$0xff]
  %v1595 = vld [vmem:[%s1584 + $0x50] sm:$0xff]
  %v1596 = vld [vmem:[%s1584 + $0x58] sm:$0xff]
  %v1597 = vld [vmem:[%s1584 + $0x60] sm:$0xff]
  %v1598 = vld [vmem:[%s1584 + $0x68] sm:$0xff]
  %v1599 = vld [vmem:[%s1584 + $0x70] sm:$0xff]
  %v1600 = vld [vmem:[%s1584 + $0x78] sm:$0xff]
  %v1617 = vunpack.c.l.b16 %v1585
  %v1618 = vunpack.c.h.b16 %v1585
  %v1619 = vunpack.c.l.b16 %v1586
  %v1620 = vunpack.c.h.b16 %v1586
  %v1621 = vunpack.c.l.b16 %v1587
  %v1622 = vunpack.c.h.b16 %v1587
  %v1623 = vunpack.c.l.b16 %v1588
  %v1624 = vunpack.c.h.b16 %v1588
  %v1625 = vunpack.c.l.b16 %v1589
  %v1626 = vunpack.c.h.b16 %v1589
  %v1627 = vunpack.c.l.b16 %v1590
  %v1628 = vunpack.c.h.b16 %v1590
  %v1629 = vunpack.c.l.b16 %v1591
  %v1630 = vunpack.c.h.b16 %v1591
  %v1631 = vunpack.c.l.b16 %v1592
  %v1632 = vunpack.c.h.b16 %v1592
  %v1633 = vunpack.c.l.b16 %v1593
  %v1634 = vunpack.c.h.b16 %v1593
  %v1635 = vunpack.c.l.b16 %v1594
  %v1636 = vunpack.c.h.b16 %v1594
  %v1637 = vunpack.c.l.b16 %v1595
  %v1638 = vunpack.c.h.b16 %v1595
  %v1639 = vunpack.c.l.b16 %v1596
  %v1640 = vunpack.c.h.b16 %v1596
  %v1641 = vunpack.c.l.b16 %v1597
  %v1642 = vunpack.c.h.b16 %v1597
  %v1643 = vunpack.c.l.b16 %v1598
  %v1644 = vunpack.c.h.b16 %v1598
  %v1645 = vunpack.c.l.b16 %v1599
  %v1646 = vunpack.c.h.b16 %v1599
  %v1647 = vunpack.c.l.b16 %v1600
  %v1648 = vunpack.c.h.b16 %v1600
  %v1649 = vpack.c.b16 %v1619, %v1617
  %v1650 = vpack.c.b16 %v1620, %v1618
  %v1651 = vpack.c.b16 %v1623, %v1621
  %v1652 = vpack.c.b16 %v1624, %v1622
  %v1653 = vpack.c.b16 %v1627, %v1625
  %v1654 = vpack.c.b16 %v1628, %v1626
  %v1655 = vpack.c.b16 %v1631, %v1629
  %v1656 = vpack.c.b16 %v1632, %v1630
  %v1657 = vpack.c.b16 %v1635, %v1633
  %v1658 = vpack.c.b16 %v1636, %v1634
  %v1659 = vpack.c.b16 %v1639, %v1637
  %v1660 = vpack.c.b16 %v1640, %v1638
  %v1661 = vpack.c.b16 %v1643, %v1641
  %v1662 = vpack.c.b16 %v1644, %v1642
  %v1663 = vpack.c.b16 %v1647, %v1645
  %v1664 = vpack.c.b16 %v1648, %v1646
  %1681 = vmatpush.bf16.msra.mxu0 %v1663
  %1682 = vmatpush.bf16.msra.mxu0 %v1661
  %1683 = vmatpush.bf16.msra.mxu0 %v1659
  %1684 = vmatpush.bf16.msra.mxu0 %v1657
  %1685 = vmatpush.bf16.msra.mxu0 %v1655
  %1686 = vmatpush.bf16.msra.mxu0 %v1653
  %1687 = vmatpush.bf16.msra.mxu0 %v1651
  %1688 = vmatpush.bf16.msra.mxu0 %v1649
  %1689 = vmatmul.bf16.gmra.mxu0 %v1267
  %v1690 = vpop.f32.mrf.mxu0
  %v1691 = vadd.f32 0.0, %v1690
  %v1692 = vpop.f32.mrf.mxu0
  %v1693 = vadd.f32 0.0, %v1692
  %1694 = vmatmul.bf16.gmra.mxu0 %v1268
  %v1695 = vpop.f32.mrf.mxu0
  %v1696 = vadd.f32 0.0, %v1695
  %v1697 = vpop.f32.mrf.mxu0
  %v1698 = vadd.f32 0.0, %v1697
  %1699 = vmatmul.bf16.gmra.mxu0 %v1269
  %v1700 = vpop.f32.mrf.mxu0
  %v1701 = vadd.f32 0.0, %v1700
  %v1702 = vpop.f32.mrf.mxu0
  %v1703 = vadd.f32 0.0, %v1702
  %1704 = vmatmul.bf16.gmra.mxu0 %v1583
  %v1705 = vpop.f32.mrf.mxu0
  %v1706 = vadd.f32 0.0, %v1705
  %v1707 = vpop.f32.mrf.mxu0
  %v1708 = vadd.f32 0.0, %v1707
  %1709 = vdwg.mxu0
  %1710 = vmatpush.bf16.msra.mxu0 %v1664
  %1711 = vmatpush.bf16.msra.mxu0 %v1662
  %1712 = vmatpush.bf16.msra.mxu0 %v1660
  %1713 = vmatpush.bf16.msra.mxu0 %v1658
  %1714 = vmatpush.bf16.msra.mxu0 %v1656
  %1715 = vmatpush.bf16.msra.mxu0 %v1654
  %1716 = vmatpush.bf16.msra.mxu0 %v1652
  %1717 = vmatpush.bf16.msra.mxu0 %v1650
  %1718 = vmatmul.bf16.gmra.mxu0 %v1267
  %v1719 = vpop.f32.mrf.mxu0
  %v1720 = vadd.f32 0.0, %v1719
  %v1721 = vpop.f32.mrf.mxu0
  %v1722 = vadd.f32 0.0, %v1721
  %1723 = vmatmul.bf16.gmra.mxu0 %v1268
  %v1724 = vpop.f32.mrf.mxu0
  %v1725 = vadd.f32 0.0, %v1724
  %v1726 = vpop.f32.mrf.mxu0
  %v1727 = vadd.f32 0.0, %v1726
  %1728 = vmatmul.bf16.gmra.mxu0 %v1269
  %v1729 = vpop.f32.mrf.mxu0
  %v1730 = vadd.f32 0.0, %v1729
  %v1731 = vpop.f32.mrf.mxu0
  %v1732 = vadd.f32 0.0, %v1731
  %1733 = vmatmul.bf16.gmra.mxu0 %v1583
  %v1734 = vpop.f32.mrf.mxu0
  %v1735 = vadd.f32 0.0, %v1734
  %v1736 = vpop.f32.mrf.mxu0
  %v1737 = vadd.f32 0.0, %v1736
  %1738 = vdwg.mxu0
  %v1739 = vadd.f32 %v1535, %v1691
  %v1740 = vadd.f32 %v1564, %v1720
  %v1741 = vadd.f32 %v1537, %v1693
  %v1742 = vadd.f32 %v1566, %v1722
  %v1743 = vadd.f32 %v1540, %v1696
  %v1744 = vadd.f32 %v1569, %v1725
  %v1745 = vadd.f32 %v1542, %v1698
  %v1746 = vadd.f32 %v1571, %v1727
  %v1747 = vadd.f32 %v1545, %v1701
  %v1748 = vadd.f32 %v1574, %v1730
  %v1749 = vadd.f32 %v1547, %v1703
  %v1750 = vadd.f32 %v1576, %v1732
  %v1751 = vadd.f32 %v1550, %v1706
  %v1752 = vadd.f32 %v1579, %v1735
  %v1753 = vadd.f32 %v1552, %v1708
  %v1754 = vadd.f32 %v1581, %v1737
  %v1755 = vpack.c.bf16 %v1264, %v1263
  %s1756 = scalar_lea.vmem %s3, 384
  %v1757 = vld [vmem:[%s1756] sm:$0xff]
  %v1758 = vld [vmem:[%s1756 + $0x8] sm:$0xff]
  %v1759 = vld [vmem:[%s1756 + $0x10] sm:$0xff]
  %v1760 = vld [vmem:[%s1756 + $0x18] sm:$0xff]
  %v1761 = vld [vmem:[%s1756 + $0x20] sm:$0xff]
  %v1762 = vld [vmem:[%s1756 + $0x28] sm:$0xff]
  %v1763 = vld [vmem:[%s1756 + $0x30] sm:$0xff]
  %v1764 = vld [vmem:[%s1756 + $0x38] sm:$0xff]
  %v1765 = vld [vmem:[%s1756 + $0x40] sm:$0xff]
  %v1766 = vld [vmem:[%s1756 + $0x48] sm:$0xff]
  %v1767 = vld [vmem:[%s1756 + $0x50] sm:$0xff]
  %v1768 = vld [vmem:[%s1756 + $0x58] sm:$0xff]
  %v1769 = vld [vmem:[%s1756 + $0x60] sm:$0xff]
  %v1770 = vld [vmem:[%s1756 + $0x68] sm:$0xff]
  %v1771 = vld [vmem:[%s1756 + $0x70] sm:$0xff]
  %v1772 = vld [vmem:[%s1756 + $0x78] sm:$0xff]
  %v1789 = vunpack.c.l.b16 %v1757
  %v1790 = vunpack.c.h.b16 %v1757
  %v1791 = vunpack.c.l.b16 %v1758
  %v1792 = vunpack.c.h.b16 %v1758
  %v1793 = vunpack.c.l.b16 %v1759
  %v1794 = vunpack.c.h.b16 %v1759
  %v1795 = vunpack.c.l.b16 %v1760
  %v1796 = vunpack.c.h.b16 %v1760
  %v1797 = vunpack.c.l.b16 %v1761
  %v1798 = vunpack.c.h.b16 %v1761
  %v1799 = vunpack.c.l.b16 %v1762
  %v1800 = vunpack.c.h.b16 %v1762
  %v1801 = vunpack.c.l.b16 %v1763
  %v1802 = vunpack.c.h.b16 %v1763
  %v1803 = vunpack.c.l.b16 %v1764
  %v1804 = vunpack.c.h.b16 %v1764
  %v1805 = vunpack.c.l.b16 %v1765
  %v1806 = vunpack.c.h.b16 %v1765
  %v1807 = vunpack.c.l.b16 %v1766
  %v1808 = vunpack.c.h.b16 %v1766
  %v1809 = vunpack.c.l.b16 %v1767
  %v1810 = vunpack.c.h.b16 %v1767
  %v1811 = vunpack.c.l.b16 %v1768
  %v1812 = vunpack.c.h.b16 %v1768
  %v1813 = vunpack.c.l.b16 %v1769
  %v1814 = vunpack.c.h.b16 %v1769
  %v1815 = vunpack.c.l.b16 %v1770
  %v1816 = vunpack.c.h.b16 %v1770
  %v1817 = vunpack.c.l.b16 %v1771
  %v1818 = vunpack.c.h.b16 %v1771
  %v1819 = vunpack.c.l.b16 %v1772
  %v1820 = vunpack.c.h.b16 %v1772
  %v1821 = vpack.c.b16 %v1791, %v1789
  %v1822 = vpack.c.b16 %v1792, %v1790
  %v1823 = vpack.c.b16 %v1795, %v1793
  %v1824 = vpack.c.b16 %v1796, %v1794
  %v1825 = vpack.c.b16 %v1799, %v1797
  %v1826 = vpack.c.b16 %v1800, %v1798
  %v1827 = vpack.c.b16 %v1803, %v1801
  %v1828 = vpack.c.b16 %v1804, %v1802
  %v1829 = vpack.c.b16 %v1807, %v1805
  %v1830 = vpack.c.b16 %v1808, %v1806
  %v1831 = vpack.c.b16 %v1811, %v1809
  %v1832 = vpack.c.b16 %v1812, %v1810
  %v1833 = vpack.c.b16 %v1815, %v1813
  %v1834 = vpack.c.b16 %v1816, %v1814
  %v1835 = vpack.c.b16 %v1819, %v1817
  %v1836 = vpack.c.b16 %v1820, %v1818
  %1853 = vmatpush.bf16.msra.mxu0 %v1835
  %1854 = vmatpush.bf16.msra.mxu0 %v1833
  %1855 = vmatpush.bf16.msra.mxu0 %v1831
  %1856 = vmatpush.bf16.msra.mxu0 %v1829
  %1857 = vmatpush.bf16.msra.mxu0 %v1827
  %1858 = vmatpush.bf16.msra.mxu0 %v1825
  %1859 = vmatpush.bf16.msra.mxu0 %v1823
  %1860 = vmatpush.bf16.msra.mxu0 %v1821
  %1861 = vmatmul.bf16.gmra.mxu0 %v1287
  %v1862 = vpop.f32.mrf.mxu0
  %v1863 = vadd.f32 0.0, %v1862
  %v1864 = vpop.f32.mrf.mxu0
  %v1865 = vadd.f32 0.0, %v1864
  %1866 = vmatmul.bf16.gmra.mxu0 %v1288
  %v1867 = vpop.f32.mrf.mxu0
  %v1868 = vadd.f32 0.0, %v1867
  %v1869 = vpop.f32.mrf.mxu0
  %v1870 = vadd.f32 0.0, %v1869
  %1871 = vmatmul.bf16.gmra.mxu0 %v1289
  %v1872 = vpop.f32.mrf.mxu0
  %v1873 = vadd.f32 0.0, %v1872
  %v1874 = vpop.f32.mrf.mxu0
  %v1875 = vadd.f32 0.0, %v1874
  %1876 = vmatmul.bf16.gmra.mxu0 %v1755
  %v1877 = vpop.f32.mrf.mxu0
  %v1878 = vadd.f32 0.0, %v1877
  %v1879 = vpop.f32.mrf.mxu0
  %v1880 = vadd.f32 0.0, %v1879
  %1881 = vdwg.mxu0
  %1882 = vmatpush.bf16.msra.mxu0 %v1836
  %1883 = vmatpush.bf16.msra.mxu0 %v1834
  %1884 = vmatpush.bf16.msra.mxu0 %v1832
  %1885 = vmatpush.bf16.msra.mxu0 %v1830
  %1886 = vmatpush.bf16.msra.mxu0 %v1828
  %1887 = vmatpush.bf16.msra.mxu0 %v1826
  %1888 = vmatpush.bf16.msra.mxu0 %v1824
  %1889 = vmatpush.bf16.msra.mxu0 %v1822
  %1890 = vmatmul.bf16.gmra.mxu0 %v1287
  %v1891 = vpop.f32.mrf.mxu0
  %v1892 = vadd.f32 0.0, %v1891
  %v1893 = vpop.f32.mrf.mxu0
  %v1894 = vadd.f32 0.0, %v1893
  %1895 = vmatmul.bf16.gmra.mxu0 %v1288
  %v1896 = vpop.f32.mrf.mxu0
  %v1897 = vadd.f32 0.0, %v1896
  %v1898 = vpop.f32.mrf.mxu0
  %v1899 = vadd.f32 0.0, %v1898
  %1900 = vmatmul.bf16.gmra.mxu0 %v1289
  %v1901 = vpop.f32.mrf.mxu0
  %v1902 = vadd.f32 0.0, %v1901
  %v1903 = vpop.f32.mrf.mxu0
  %v1904 = vadd.f32 0.0, %v1903
  %1905 = vmatmul.bf16.gmra.mxu0 %v1755
  %v1906 = vpop.f32.mrf.mxu0
  %v1907 = vadd.f32 0.0, %v1906
  %v1908 = vpop.f32.mrf.mxu0
  %v1909 = vadd.f32 0.0, %v1908
  %1910 = vdwg.mxu0
  %v1911 = vadd.f32 %v1739, %v1863
  %v1912 = vadd.f32 %v1740, %v1892
  %v1913 = vadd.f32 %v1741, %v1865
  %v1914 = vadd.f32 %v1742, %v1894
  %v1915 = vadd.f32 %v1743, %v1868
  %v1916 = vadd.f32 %v1744, %v1897
  %v1917 = vadd.f32 %v1745, %v1870
  %v1918 = vadd.f32 %v1746, %v1899
  %v1919 = vadd.f32 %v1747, %v1873
  %v1920 = vadd.f32 %v1748, %v1902
  %v1921 = vadd.f32 %v1749, %v1875
  %v1922 = vadd.f32 %v1750, %v1904
  %v1923 = vadd.f32 %v1751, %v1878
  %v1924 = vadd.f32 %v1752, %v1907
  %v1925 = vadd.f32 %v1753, %v1880
  %v1926 = vadd.f32 %v1754, %v1909
  %v1927 = vpack.c.bf16 %v1265, %v1264
  %s1928 = scalar_lea.vmem %s3, 512
  %v1929 = vld [vmem:[%s1928] sm:$0xff]
  %v1930 = vld [vmem:[%s1928 + $0x8] sm:$0xff]
  %v1931 = vld [vmem:[%s1928 + $0x10] sm:$0xff]
  %v1932 = vld [vmem:[%s1928 + $0x18] sm:$0xff]
  %v1933 = vld [vmem:[%s1928 + $0x20] sm:$0xff]
  %v1934 = vld [vmem:[%s1928 + $0x28] sm:$0xff]
  %v1935 = vld [vmem:[%s1928 + $0x30] sm:$0xff]
  %v1936 = vld [vmem:[%s1928 + $0x38] sm:$0xff]
  %v1937 = vld [vmem:[%s1928 + $0x40] sm:$0xff]
  %v1938 = vld [vmem:[%s1928 + $0x48] sm:$0xff]
  %v1939 = vld [vmem:[%s1928 + $0x50] sm:$0xff]
  %v1940 = vld [vmem:[%s1928 + $0x58] sm:$0xff]
  %v1941 = vld [vmem:[%s1928 + $0x60] sm:$0xff]
  %v1942 = vld [vmem:[%s1928 + $0x68] sm:$0xff]
  %v1943 = vld [vmem:[%s1928 + $0x70] sm:$0xff]
  %v1944 = vld [vmem:[%s1928 + $0x78] sm:$0xff]
  %v1961 = vunpack.c.l.b16 %v1929
  %v1962 = vunpack.c.h.b16 %v1929
  %v1963 = vunpack.c.l.b16 %v1930
  %v1964 = vunpack.c.h.b16 %v1930
  %v1965 = vunpack.c.l.b16 %v1931
  %v1966 = vunpack.c.h.b16 %v1931
  %v1967 = vunpack.c.l.b16 %v1932
  %v1968 = vunpack.c.h.b16 %v1932
  %v1969 = vunpack.c.l.b16 %v1933
  %v1970 = vunpack.c.h.b16 %v1933
  %v1971 = vunpack.c.l.b16 %v1934
  %v1972 = vunpack.c.h.b16 %v1934
  %v1973 = vunpack.c.l.b16 %v1935
  %v1974 = vunpack.c.h.b16 %v1935
  %v1975 = vunpack.c.l.b16 %v1936
  %v1976 = vunpack.c.h.b16 %v1936
  %v1977 = vunpack.c.l.b16 %v1937
  %v1978 = vunpack.c.h.b16 %v1937
  %v1979 = vunpack.c.l.b16 %v1938
  %v1980 = vunpack.c.h.b16 %v1938
  %v1981 = vunpack.c.l.b16 %v1939
  %v1982 = vunpack.c.h.b16 %v1939
  %v1983 = vunpack.c.l.b16 %v1940
  %v1984 = vunpack.c.h.b16 %v1940
  %v1985 = vunpack.c.l.b16 %v1941
  %v1986 = vunpack.c.h.b16 %v1941
  %v1987 = vunpack.c.l.b16 %v1942
  %v1988 = vunpack.c.h.b16 %v1942
  %v1989 = vunpack.c.l.b16 %v1943
  %v1990 = vunpack.c.h.b16 %v1943
  %v1991 = vunpack.c.l.b16 %v1944
  %v1992 = vunpack.c.h.b16 %v1944
  %v1993 = vpack.c.b16 %v1963, %v1961
  %v1994 = vpack.c.b16 %v1964, %v1962
  %v1995 = vpack.c.b16 %v1967, %v1965
  %v1996 = vpack.c.b16 %v1968, %v1966
  %v1997 = vpack.c.b16 %v1971, %v1969
  %v1998 = vpack.c.b16 %v1972, %v1970
  %v1999 = vpack.c.b16 %v1975, %v1973
  %v2000 = vpack.c.b16 %v1976, %v1974
  %v2001 = vpack.c.b16 %v1979, %v1977
  %v2002 = vpack.c.b16 %v1980, %v1978
  %v2003 = vpack.c.b16 %v1983, %v1981
  %v2004 = vpack.c.b16 %v1984, %v1982
  %v2005 = vpack.c.b16 %v1987, %v1985
  %v2006 = vpack.c.b16 %v1988, %v1986
  %v2007 = vpack.c.b16 %v1991, %v1989
  %v2008 = vpack.c.b16 %v1992, %v1990
  %2025 = vmatpush.bf16.msra.mxu0 %v2007
  %2026 = vmatpush.bf16.msra.mxu0 %v2005
  %2027 = vmatpush.bf16.msra.mxu0 %v2003
  %2028 = vmatpush.bf16.msra.mxu0 %v2001
  %2029 = vmatpush.bf16.msra.mxu0 %v1999
  %2030 = vmatpush.bf16.msra.mxu0 %v1997
  %2031 = vmatpush.bf16.msra.mxu0 %v1995
  %2032 = vmatpush.bf16.msra.mxu0 %v1993
  %2033 = vmatmul.bf16.gmra.mxu0 %v1268
  %v2034 = vpop.f32.mrf.mxu0
  %v2035 = vadd.f32 0.0, %v2034
  %v2036 = vpop.f32.mrf.mxu0
  %v2037 = vadd.f32 0.0, %v2036
  %2038 = vmatmul.bf16.gmra.mxu0 %v1269
  %v2039 = vpop.f32.mrf.mxu0
  %v2040 = vadd.f32 0.0, %v2039
  %v2041 = vpop.f32.mrf.mxu0
  %v2042 = vadd.f32 0.0, %v2041
  %2043 = vmatmul.bf16.gmra.mxu0 %v1583
  %v2044 = vpop.f32.mrf.mxu0
  %v2045 = vadd.f32 0.0, %v2044
  %v2046 = vpop.f32.mrf.mxu0
  %v2047 = vadd.f32 0.0, %v2046
  %2048 = vmatmul.bf16.gmra.mxu0 %v1927
  %v2049 = vpop.f32.mrf.mxu0
  %v2050 = vadd.f32 0.0, %v2049
  %v2051 = vpop.f32.mrf.mxu0
  %v2052 = vadd.f32 0.0, %v2051
  %2053 = vdwg.mxu0
  %2054 = vmatpush.bf16.msra.mxu0 %v2008
  %2055 = vmatpush.bf16.msra.mxu0 %v2006
  %2056 = vmatpush.bf16.msra.mxu0 %v2004
  %2057 = vmatpush.bf16.msra.mxu0 %v2002
  %2058 = vmatpush.bf16.msra.mxu0 %v2000
  %2059 = vmatpush.bf16.msra.mxu0 %v1998
  %2060 = vmatpush.bf16.msra.mxu0 %v1996
  %2061 = vmatpush.bf16.msra.mxu0 %v1994
  %2062 = vmatmul.bf16.gmra.mxu0 %v1268
  %v2063 = vpop.f32.mrf.mxu0
  %v2064 = vadd.f32 0.0, %v2063
  %v2065 = vpop.f32.mrf.mxu0
  %v2066 = vadd.f32 0.0, %v2065
  %2067 = vmatmul.bf16.gmra.mxu0 %v1269
  %v2068 = vpop.f32.mrf.mxu0
  %v2069 = vadd.f32 0.0, %v2068
  %v2070 = vpop.f32.mrf.mxu0
  %v2071 = vadd.f32 0.0, %v2070
  %2072 = vmatmul.bf16.gmra.mxu0 %v1583
  %v2073 = vpop.f32.mrf.mxu0
  %v2074 = vadd.f32 0.0, %v2073
  %v2075 = vpop.f32.mrf.mxu0
  %v2076 = vadd.f32 0.0, %v2075
  %2077 = vmatmul.bf16.gmra.mxu0 %v1927
  %v2078 = vpop.f32.mrf.mxu0
  %v2079 = vadd.f32 0.0, %v2078
  %v2080 = vpop.f32.mrf.mxu0
  %v2081 = vadd.f32 0.0, %v2080
  %2082 = vdwg.mxu0
  %v2083 = vadd.f32 %v1911, %v2035
  %v2084 = vadd.f32 %v1912, %v2064
  %v2085 = vadd.f32 %v1913, %v2037
  %v2086 = vadd.f32 %v1914, %v2066
  %v2087 = vadd.f32 %v1915, %v2040
  %v2088 = vadd.f32 %v1916, %v2069
  %v2089 = vadd.f32 %v1917, %v2042
  %v2090 = vadd.f32 %v1918, %v2071
  %v2091 = vadd.f32 %v1919, %v2045
  %v2092 = vadd.f32 %v1920, %v2074
  %v2093 = vadd.f32 %v1921, %v2047
  %v2094 = vadd.f32 %v1922, %v2076
  %v2095 = vadd.f32 %v1923, %v2050
  %v2096 = vadd.f32 %v1924, %v2079
  %v2097 = vadd.f32 %v1925, %v2052
  %v2098 = vadd.f32 %v1926, %v2081
  %v2099 = vld [vmem:[%s4] sm:$0x3]
  %v2101 = vperm.slane %v2099, 0
  %v2102 = vperm.slane %v2099, 1
  %v2105 = vadd.f32 %v2083, %v2101
  %v2106 = vadd.f32 %v2084, %v2102
  %v2107 = vadd.f32 %v2085, %v2101
  %v2108 = vadd.f32 %v2086, %v2102
  %v2109 = vadd.f32 %v2087, %v2101
  %v2110 = vadd.f32 %v2088, %v2102
  %v2111 = vadd.f32 %v2089, %v2101
  %v2112 = vadd.f32 %v2090, %v2102
  %v2113 = vadd.f32 %v2091, %v2101
  %v2114 = vadd.f32 %v2092, %v2102
  %v2115 = vadd.f32 %v2093, %v2101
  %v2116 = vadd.f32 %v2094, %v2102
  %v2117 = vadd.f32 %v2095, %v2101
  %v2118 = vadd.f32 %v2096, %v2102
  %v2119 = vadd.f32 %v2097, %v2101
  %v2120 = vadd.f32 %v2098, %v2102
  %v2121 = vmax.f32 %v2105, 0.0
  %v2122 = vmax.f32 %v2106, 0.0
  %v2123 = vmax.f32 %v2107, 0.0
  %v2124 = vmax.f32 %v2108, 0.0
  %v2125 = vmax.f32 %v2109, 0.0
  %v2126 = vmax.f32 %v2110, 0.0
  %v2127 = vmax.f32 %v2111, 0.0
  %v2128 = vmax.f32 %v2112, 0.0
  %v2129 = vmax.f32 %v2113, 0.0
  %v2130 = vmax.f32 %v2114, 0.0
  %v2131 = vmax.f32 %v2115, 0.0
  %v2132 = vmax.f32 %v2116, 0.0
  %v2133 = vmax.f32 %v2117, 0.0
  %v2134 = vmax.f32 %v2118, 0.0
  %v2135 = vmax.f32 %v2119, 0.0
  %v2136 = vmax.f32 %v2120, 0.0
  %v2137 = vmax.f32 %v2121, %v2123
  %v2138 = vmax.f32 %v2122, %v2124
  %v2139 = vmax.f32 %v2125, %v2127
  %v2140 = vmax.f32 %v2126, %v2128
  %v2141 = vmax.f32 %v2129, %v2131
  %v2142 = vmax.f32 %v2130, %v2132
  %v2143 = vmax.f32 %v2133, %v2135
  %v2144 = vmax.f32 %v2134, %v2136
  %v2145 = vmax.f32 %v2137, %v2138
  %v2146 = vmax.f32 %v2139, %v2140
  %v2147 = vmax.f32 %v2141, %v2142
  %v2148 = vmax.f32 %v2143, %v2144
  %v2149 = vpack.c.bf16 %v2145, %v2145
  %v2150 = vpack.c.bf16 %v2146, %v2146
  %v2151 = vpack.c.bf16 %v2147, %v2147
  %v2152 = vpack.c.bf16 %v2148, %v2148
  %v2153 = vld [vmem:[%s5] sm:$0xf]
  %v2154 = vld [vmem:[%s5 + $0x4] sm:$0xf]
  %v2155 = vld [vmem:[%s5 + $0x8] sm:$0xf]
  %v2156 = vld [vmem:[%s5 + $0xc] sm:$0xf]
  %v2157 = vld [vmem:[%s5 + $0x10] sm:$0xf]
  %v2158 = vld [vmem:[%s5 + $0x14] sm:$0xf]
  %v2159 = vld [vmem:[%s5 + $0x18] sm:$0xf]
  %v2160 = vld [vmem:[%s5 + $0x1c] sm:$0xf]
  %v2161 = vld [vmem:[%s5 + $0x20] sm:$0xf]
  %v2162 = vld [vmem:[%s5 + $0x24] sm:$0xf]
  %v2163 = vld [vmem:[%s5 + $0x28] sm:$0xf]
  %v2164 = vld [vmem:[%s5 + $0x2c] sm:$0xf]
  %v2165 = vld [vmem:[%s5 + $0x30] sm:$0xf]
  %v2166 = vld [vmem:[%s5 + $0x34] sm:$0xf]
  %v2167 = vld [vmem:[%s5 + $0x38] sm:$0xf]
  %v2168 = vld [vmem:[%s5 + $0x3c] sm:$0xf]
  %v2169 = vld [vmem:[%s5 + $0x40] sm:$0xf]
  %v2170 = vld [vmem:[%s5 + $0x44] sm:$0xf]
  %v2171 = vld [vmem:[%s5 + $0x48] sm:$0xf]
  %v2172 = vld [vmem:[%s5 + $0x4c] sm:$0xf]
  %v2173 = vld [vmem:[%s5 + $0x50] sm:$0xf]
  %v2174 = vld [vmem:[%s5 + $0x54] sm:$0xf]
  %v2175 = vld [vmem:[%s5 + $0x58] sm:$0xf]
  %v2176 = vld [vmem:[%s5 + $0x5c] sm:$0xf]
  %v2177 = vld [vmem:[%s5 + $0x60] sm:$0xf]
  %v2178 = vld [vmem:[%s5 + $0x64] sm:$0xf]
  %v2179 = vld [vmem:[%s5 + $0x68] sm:$0xf]
  %v2180 = vld [vmem:[%s5 + $0x6c] sm:$0xf]
  %v2181 = vld [vmem:[%s5 + $0x70] sm:$0xf]
  %v2182 = vld [vmem:[%s5 + $0x74] sm:$0xf]
  %v2183 = vld [vmem:[%s5 + $0x78] sm:$0xf]
  %v2184 = vld [vmem:[%s5 + $0x7c] sm:$0xf]
  %v2185 = vld [vmem:[%s5 + $0x80] sm:$0xf]
  %v2186 = vld [vmem:[%s5 + $0x84] sm:$0xf]
  %v2187 = vld [vmem:[%s5 + $0x88] sm:$0xf]
  %v2188 = vld [vmem:[%s5 + $0x8c] sm:$0xf]
  %v2189 = vld [vmem:[%s5 + $0x90] sm:$0xf]
  %v2190 = vld [vmem:[%s5 + $0x94] sm:$0xf]
  %v2191 = vld [vmem:[%s5 + $0x98] sm:$0xf]
  %v2192 = vld [vmem:[%s5 + $0x9c] sm:$0xf]
  %v2193 = vld [vmem:[%s5 + $0xa0] sm:$0xf]
  %v2194 = vld [vmem:[%s5 + $0xa4] sm:$0xf]
  %v2195 = vld [vmem:[%s5 + $0xa8] sm:$0xf]
  %v2196 = vld [vmem:[%s5 + $0xac] sm:$0xf]
  %v2197 = vld [vmem:[%s5 + $0xb0] sm:$0xf]
  %v2198 = vld [vmem:[%s5 + $0xb4] sm:$0xf]
  %v2199 = vld [vmem:[%s5 + $0xb8] sm:$0xf]
  %v2200 = vld [vmem:[%s5 + $0xbc] sm:$0xf]
  %v2201 = vld [vmem:[%s5 + $0xc0] sm:$0xf]
  %v2202 = vld [vmem:[%s5 + $0xc4] sm:$0xf]
  %v2203 = vld [vmem:[%s5 + $0xc8] sm:$0xf]
  %v2204 = vld [vmem:[%s5 + $0xcc] sm:$0xf]
  %v2205 = vld [vmem:[%s5 + $0xd0] sm:$0xf]
  %v2206 = vld [vmem:[%s5 + $0xd4] sm:$0xf]
  %v2207 = vld [vmem:[%s5 + $0xd8] sm:$0xf]
  %v2208 = vld [vmem:[%s5 + $0xdc] sm:$0xf]
  %v2209 = vld [vmem:[%s5 + $0xe0] sm:$0xf]
  %v2210 = vld [vmem:[%s5 + $0xe4] sm:$0xf]
  %v2211 = vld [vmem:[%s5 + $0xe8] sm:$0xf]
  %v2212 = vld [vmem:[%s5 + $0xec] sm:$0xf]
  %v2213 = vld [vmem:[%s5 + $0xf0] sm:$0xf]
  %v2214 = vld [vmem:[%s5 + $0xf4] sm:$0xf]
  %v2215 = vld [vmem:[%s5 + $0xf8] sm:$0xf]
  %v2216 = vld [vmem:[%s5 + $0xfc] sm:$0xf]
  %v2217 = vld [vmem:[%s6] sm:$0x1]
  %v2219 = vperm.slane %v2217, 0
  %v2285 = vunpack.c.l.b16 %v2153
  %v2286 = vunpack.c.l.b16 %v2154
  %v2287 = vunpack.c.l.b16 %v2155
  %v2288 = vunpack.c.l.b16 %v2156
  %v2289 = vunpack.c.l.b16 %v2157
  %v2290 = vunpack.c.l.b16 %v2158
  %v2291 = vunpack.c.l.b16 %v2159
  %v2292 = vunpack.c.l.b16 %v2160
  %v2293 = vunpack.c.l.b16 %v2161
  %v2294 = vunpack.c.l.b16 %v2162
  %v2295 = vunpack.c.l.b16 %v2163
  %v2296 = vunpack.c.l.b16 %v2164
  %v2297 = vunpack.c.l.b16 %v2165
  %v2298 = vunpack.c.l.b16 %v2166
  %v2299 = vunpack.c.l.b16 %v2167
  %v2300 = vunpack.c.l.b16 %v2168
  %v2301 = vunpack.c.l.b16 %v2169
  %v2302 = vunpack.c.l.b16 %v2170
  %v2303 = vunpack.c.l.b16 %v2171
  %v2304 = vunpack.c.l.b16 %v2172
  %v2305 = vunpack.c.l.b16 %v2173
  %v2306 = vunpack.c.l.b16 %v2174
  %v2307 = vunpack.c.l.b16 %v2175
  %v2308 = vunpack.c.l.b16 %v2176
  %v2309 = vunpack.c.l.b16 %v2177
  %v2310 = vunpack.c.l.b16 %v2178
  %v2311 = vunpack.c.l.b16 %v2179
  %v2312 = vunpack.c.l.b16 %v2180
  %v2313 = vunpack.c.l.b16 %v2181
  %v2314 = vunpack.c.l.b16 %v2182
  %v2315 = vunpack.c.l.b16 %v2183
  %v2316 = vunpack.c.l.b16 %v2184
  %v2317 = vunpack.c.l.b16 %v2185
  %v2318 = vunpack.c.l.b16 %v2186
  %v2319 = vunpack.c.l.b16 %v2187
  %v2320 = vunpack.c.l.b16 %v2188
  %v2321 = vunpack.c.l.b16 %v2189
  %v2322 = vunpack.c.l.b16 %v2190
  %v2323 = vunpack.c.l.b16 %v2191
  %v2324 = vunpack.c.l.b16 %v2192
  %v2325 = vunpack.c.l.b16 %v2193
  %v2326 = vunpack.c.l.b16 %v2194
  %v2327 = vunpack.c.l.b16 %v2195
  %v2328 = vunpack.c.l.b16 %v2196
  %v2329 = vunpack.c.l.b16 %v2197
  %v2330 = vunpack.c.l.b16 %v2198
  %v2331 = vunpack.c.l.b16 %v2199
  %v2332 = vunpack.c.l.b16 %v2200
  %v2333 = vunpack.c.l.b16 %v2201
  %v2334 = vunpack.c.l.b16 %v2202
  %v2335 = vunpack.c.l.b16 %v2203
  %v2336 = vunpack.c.l.b16 %v2204
  %v2337 = vunpack.c.l.b16 %v2205
  %v2338 = vunpack.c.l.b16 %v2206
  %v2339 = vunpack.c.l.b16 %v2207
  %v2340 = vunpack.c.l.b16 %v2208
  %v2341 = vunpack.c.l.b16 %v2209
  %v2342 = vunpack.c.l.b16 %v2210
  %v2343 = vunpack.c.l.b16 %v2211
  %v2344 = vunpack.c.l.b16 %v2212
  %v2345 = vunpack.c.l.b16 %v2213
  %v2346 = vunpack.c.l.b16 %v2214
  %v2347 = vunpack.c.l.b16 %v2215
  %v2348 = vunpack.c.l.b16 %v2216
  %v2349 = vpack.c.b16 %v2286, %v2285
  %v2350 = vpack.c.b16 %v2288, %v2287
  %v2351 = vpack.c.b16 %v2290, %v2289
  %v2352 = vpack.c.b16 %v2292, %v2291
  %v2353 = vpack.c.b16 %v2294, %v2293
  %v2354 = vpack.c.b16 %v2296, %v2295
  %v2355 = vpack.c.b16 %v2298, %v2297
  %v2356 = vpack.c.b16 %v2300, %v2299
  %v2357 = vpack.c.b16 %v2302, %v2301
  %v2358 = vpack.c.b16 %v2304, %v2303
  %v2359 = vpack.c.b16 %v2306, %v2305
  %v2360 = vpack.c.b16 %v2308, %v2307
  %v2361 = vpack.c.b16 %v2310, %v2309
  %v2362 = vpack.c.b16 %v2312, %v2311
  %v2363 = vpack.c.b16 %v2314, %v2313
  %v2364 = vpack.c.b16 %v2316, %v2315
  %v2365 = vpack.c.b16 %v2318, %v2317
  %v2366 = vpack.c.b16 %v2320, %v2319
  %v2367 = vpack.c.b16 %v2322, %v2321
  %v2368 = vpack.c.b16 %v2324, %v2323
  %v2369 = vpack.c.b16 %v2326, %v2325
  %v2370 = vpack.c.b16 %v2328, %v2327
  %v2371 = vpack.c.b16 %v2330, %v2329
  %v2372 = vpack.c.b16 %v2332, %v2331
  %v2373 = vpack.c.b16 %v2334, %v2333
  %v2374 = vpack.c.b16 %v2336, %v2335
  %v2375 = vpack.c.b16 %v2338, %v2337
  %v2376 = vpack.c.b16 %v2340, %v2339
  %v2377 = vpack.c.b16 %v2342, %v2341
  %v2378 = vpack.c.b16 %v2344, %v2343
  %v2379 = vpack.c.b16 %v2346, %v2345
  %v2380 = vpack.c.b16 %v2348, %v2347
  %2413 = vmatpush.bf16.msra.mxu0 %v2356
  %2414 = vmatpush.bf16.msra.mxu0 %v2355
  %2415 = vmatpush.bf16.msra.mxu0 %v2354
  %2416 = vmatpush.bf16.msra.mxu0 %v2353
  %2417 = vmatpush.bf16.msra.mxu0 %v2352
  %2418 = vmatpush.bf16.msra.mxu0 %v2351
  %2419 = vmatpush.bf16.msra.mxu0 %v2350
  %2420 = vmatpush.bf16.msra.mxu0 %v2349
  %2421 = vmatmul.bf16.gmra.mxu0 %v2149
  %v2422 = vpop.f32.mrf.mxu0
  %v2423 = vadd.f32 %v2219, %v2422
  %v2424 = vpop.f32.mrf.mxu0
  %2425 = vdwg.mxu0
  %2426 = vmatpush.bf16.msra.mxu0 %v2364
  %2427 = vmatpush.bf16.msra.mxu0 %v2363
  %2428 = vmatpush.bf16.msra.mxu0 %v2362
  %2429 = vmatpush.bf16.msra.mxu0 %v2361
  %2430 = vmatpush.bf16.msra.mxu0 %v2360
  %2431 = vmatpush.bf16.msra.mxu0 %v2359
  %2432 = vmatpush.bf16.msra.mxu0 %v2358
  %2433 = vmatpush.bf16.msra.mxu0 %v2357
  %2434 = vmatmul.bf16.gmra.mxu0 %v2150
  %v2435 = vpop.f32.mrf.mxu0
  %v2436 = vadd.f32 %v2423, %v2435
  %v2437 = vpop.f32.mrf.mxu0
  %2438 = vdwg.mxu0
  %2439 = vmatpush.bf16.msra.mxu0 %v2372
  %2440 = vmatpush.bf16.msra.mxu0 %v2371
  %2441 = vmatpush.bf16.msra.mxu0 %v2370
  %2442 = vmatpush.bf16.msra.mxu0 %v2369
  %2443 = vmatpush.bf16.msra.mxu0 %v2368
  %2444 = vmatpush.bf16.msra.mxu0 %v2367
  %2445 = vmatpush.bf16.msra.mxu0 %v2366
  %2446 = vmatpush.bf16.msra.mxu0 %v2365
  %2447 = vmatmul.bf16.gmra.mxu0 %v2151
  %v2448 = vpop.f32.mrf.mxu0
  %v2449 = vadd.f32 %v2436, %v2448
  %v2450 = vpop.f32.mrf.mxu0
  %2451 = vdwg.mxu0
  %2452 = vmatpush.bf16.msra.mxu0 %v2380
  %2453 = vmatpush.bf16.msra.mxu0 %v2379
  %2454 = vmatpush.bf16.msra.mxu0 %v2378
  %2455 = vmatpush.bf16.msra.mxu0 %v2377
  %2456 = vmatpush.bf16.msra.mxu0 %v2376
  %2457 = vmatpush.bf16.msra.mxu0 %v2375
  %2458 = vmatpush.bf16.msra.mxu0 %v2374
  %2459 = vmatpush.bf16.msra.mxu0 %v2373
  %2460 = vmatmul.bf16.gmra.mxu0 %v2152
  %v2461 = vpop.f32.mrf.mxu0
  %v2462 = vadd.f32 %v2449, %v2461
  %v2463 = vpop.f32.mrf.mxu0
  %2464 = vdwg.mxu0
  %v2465 = vmax.f32 %v2462, 0.0
  %v2466 = vpack.c.bf16 %v2465, %v2465
  %v2467 = vld [vmem:[%s7] sm:$0xf]
  %v2468 = vld [vmem:[%s7 + $0x4] sm:$0xf]
  %v2469 = vld [vmem:[%s7 + $0x8] sm:$0xf]
  %v2470 = vld [vmem:[%s7 + $0xc] sm:$0xf]
  %v2471 = vld [vmem:[%s7 + $0x10] sm:$0xf]
  %v2472 = vld [vmem:[%s7 + $0x14] sm:$0xf]
  %v2473 = vld [vmem:[%s7 + $0x18] sm:$0xf]
  %v2474 = vld [vmem:[%s7 + $0x1c] sm:$0xf]
  %v2475 = vld [vmem:[%s7 + $0x20] sm:$0xf]
  %v2476 = vld [vmem:[%s7 + $0x24] sm:$0xf]
  %v2477 = vld [vmem:[%s7 + $0x28] sm:$0xf]
  %v2478 = vld [vmem:[%s7 + $0x2c] sm:$0xf]
  %v2479 = vld [vmem:[%s7 + $0x30] sm:$0xf]
  %v2480 = vld [vmem:[%s7 + $0x34] sm:$0xf]
  %v2481 = vld [vmem:[%s7 + $0x38] sm:$0xf]
  %v2482 = vld [vmem:[%s7 + $0x3c] sm:$0xf]
  %v2483 = vld [vmem:[%s8] sm:$0x1]
  %v2485 = vperm.slane %v2483, 0
  %v2503 = vunpack.c.l.b16 %v2467
  %v2504 = vunpack.c.l.b16 %v2468
  %v2505 = vunpack.c.l.b16 %v2469
  %v2506 = vunpack.c.l.b16 %v2470
  %v2507 = vunpack.c.l.b16 %v2471
  %v2508 = vunpack.c.l.b16 %v2472
  %v2509 = vunpack.c.l.b16 %v2473
  %v2510 = vunpack.c.l.b16 %v2474
  %v2511 = vunpack.c.l.b16 %v2475
  %v2512 = vunpack.c.l.b16 %v2476
  %v2513 = vunpack.c.l.b16 %v2477
  %v2514 = vunpack.c.l.b16 %v2478
  %v2515 = vunpack.c.l.b16 %v2479
  %v2516 = vunpack.c.l.b16 %v2480
  %v2517 = vunpack.c.l.b16 %v2481
  %v2518 = vunpack.c.l.b16 %v2482
  %v2519 = vpack.c.b16 %v2504, %v2503
  %v2520 = vpack.c.b16 %v2506, %v2505
  %v2521 = vpack.c.b16 %v2508, %v2507
  %v2522 = vpack.c.b16 %v2510, %v2509
  %v2523 = vpack.c.b16 %v2512, %v2511
  %v2524 = vpack.c.b16 %v2514, %v2513
  %v2525 = vpack.c.b16 %v2516, %v2515
  %v2526 = vpack.c.b16 %v2518, %v2517
  %2535 = vmatpush.bf16.msra.mxu0 %v2526
  %2536 = vmatpush.bf16.msra.mxu0 %v2525
  %2537 = vmatpush.bf16.msra.mxu0 %v2524
  %2538 = vmatpush.bf16.msra.mxu0 %v2523
  %2539 = vmatpush.bf16.msra.mxu0 %v2522
  %2540 = vmatpush.bf16.msra.mxu0 %v2521
  %2541 = vmatpush.bf16.msra.mxu0 %v2520
  %2542 = vmatpush.bf16.msra.mxu0 %v2519
  %2543 = vmatmul.bf16.gmra.mxu0 %v2466
  %v2544 = vpop.f32.mrf.mxu0
  %v2545 = vadd.f32 %v2485, %v2544
  %v2546 = vpop.f32.mrf.mxu0
  %2547 = vdwg.mxu0
  %v2548 = vmax.f32 %v2545, 0.0
  %2549 = vst [vmem:[%s9] sm:$0xff] %v2548
  // Predicated region
  $region38: #{mnist_convnet_forward.1} parent=0 // pred_check
    _
  $region39: #{mnist_convnet_forward.1} parent=0 // pred_check_branch
    %2551 = sbr.rel (0) target = $region41
  $region40: #{mnist_convnet_forward.1} parent=0 // pred_region
    _
  $region41: #{mnist_convnet_forward.1} parent=0 // pred_fallthru
    _
  // Predicated region
  $region42: #{mnist_convnet_forward.1} parent=0 // pred_check
    _
  $region43: #{mnist_convnet_forward.1} parent=0 // pred_check_branch
    %2553 = sbr.rel (0) target = $region45
  $region44: #{mnist_convnet_forward.1} parent=0 // pred_region
    _
  $region45: #{mnist_convnet_forward.1} parent=0 // pred_fallthru
    _

</llo_original>
